<compile_context>
chip_gen: v5e
topology: v5e:2x2
jax: 0.10.0
libtpu: 0.0.40
codegen_flags: <defaults>
</compile_context>

<pallas_src>
import functools

import jax
import jax.numpy as jnp
from jax import lax
from jax.experimental import pallas as pl
from jax.experimental.pallas import tpu as pltpu


def _round_up(x, m):
    return ((x + m - 1) // m) * m


# ----------------------------------------------------------------------------
# Kernel
# ----------------------------------------------------------------------------
def _double_conv_kernel(x_ref, w1_ref, sb1_ref, w2_ref, sb2_ref, wr_ref,
                        sbr_ref, mask_ref, o_ref,
                        col1_ref, hp_ref, col2_ref, acc_ref, res_ref,
                        *, TH, W, Wp, N1, N2):
    """One (batch, row-tile) step of the fused double_conv.

    x_ref   : (1, 1, Cin, LSTRIP) bf16  flat, zero-padded input strip
              (rows r*TH-2 .. r*TH+TH+1, cols -2..W-1, row stride Wp = W+2)
    w1_ref  : (Cmid, 9*Cin)   f32   conv1 weights, columns (ky,kx,ci)-major
    sb1_ref : (Cmid, 2)       f32   folded BN1 scale / bias
    w2_ref  : (3, Cout, 3*Cmid) bf16 conv2 weights grouped by ky, cols (kx,cm)
    sb2_ref : (Cout, 2)       f32   folded BN2 scale / bias
    wr_ref  : (Cout, Cin)     bf16  residual 1x1 conv weights
    sbr_ref : (Cout, 2)       f32   folded BN3 scale / bias
    mask_ref: (1, N1)         f32   1.0 on valid columns of the flat h grid
    o_ref   : (1, Cout, TH*W) f32   NCHW-flat output tile (lane dense)
    scratch : col1 (9*Cin, N1) f32, hp (Cmid, N1) bf16, col2 (3*Cmid, N2) bf16,
              acc/res (Cout, N2) f32
    """
    Cin = x_ref.shape[2]
    Cmid = w1_ref.shape[0]
    Cout = w2_ref.shape[1]
    r = pl.program_id(1)
    last_r = pl.num_programs(1) - 1

    # ---- conv1: 9 contiguous-lane tap slices -> one K = 9*Cin matmul.
    for ky in range(3):
        for kx in range(3):
            t = ky * 3 + kx
            off = ky * Wp + kx
            col1_ref[t * Cin:(t + 1) * Cin, :] = (
                x_ref[0, 0, :, off:off + N1].astype(col1_ref.dtype))
    acc1 = jnp.dot(w1_ref[...], col1_ref[...],
                   preferred_element_type=jnp.float32)          # (Cmid, N1)
    s1 = sb1_ref[:, 0:1]
    b1 = sb1_ref[:, 1:2]
    # BN1 + ReLU; the mask zeroes the left/right padding columns of the h grid
    # (they are conv2's horizontal 'SAME' padding).
    h = jnp.maximum(acc1 * s1 + b1, 0.0) * mask_ref[...]
    hp_ref[...] = h.astype(hp_ref.dtype)                        # stays in VMEM only

    # The h rows that are conv2's top / bottom 'SAME' padding must be zero.
    # (Per-step data logic, NOT a scratch-reuse trick -> safe under parallel grids.)
    @pl.when(r == 0)
    def _():
        hp_ref[:, 0:Wp] = jnp.zeros((Cmid, Wp), hp_ref.dtype)

    @pl.when(r == last_r)
    def _():
        hp_ref[:, (TH + 1) * Wp:(TH + 2) * Wp] = jnp.zeros((Cmid, Wp), hp_ref.dtype)

    # ---- conv2: 3 ky-grouped matmuls, each with K = 3*Cmid and N = TH*Wp pixels.
    for ky in range(3):
        for kx in range(3):
            off = ky * Wp + kx
            col2_ref[kx * Cmid:(kx + 1) * Cmid, :] = hp_ref[:, off:off + N2]
        g = jnp.dot(w2_ref[ky], col2_ref[...],
                    preferred_element_type=jnp.float32)         # (Cout, N2)
        if ky == 0:
            acc_ref[...] = g
        else:
            acc_ref[...] += g

    # ---- residual branch: 1x1 conv + BN3 on the same flat pixel grid.
    rres = jnp.dot(wr_ref[...], x_ref[0, 0, :, 2 * Wp + 2:2 * Wp + 2 + N2],
                   preferred_element_type=jnp.float32)          # (Cout, N2)
    res_ref[...] = rres * sbr_ref[:, 0:1] + sbr_ref[:, 1:2]

    # ---- BN2 + ReLU + residual add.  Stored row-by-row, which strips the 2 junk
    #      columns per row that the shared Wp stride introduces; destination lane
    #      offsets are oi*W (128-aligned at production W).
    s2 = sb2_ref[:, 0:1]
    b2 = sb2_ref[:, 1:2]
    for oi in range(TH):
        a = oi * Wp
        y = jnp.maximum(acc_ref[:, a:a + W] * s2 + b2, 0.0) + res_ref[:, a:a + W]
        o_ref[0, :, oi * W:(oi + 1) * W] = y.astype(o_ref.dtype)


# ----------------------------------------------------------------------------
# Tiling / VMEM budgeting
# ----------------------------------------------------------------------------
def _estimate_vmem(TH, W, Cin, Cmid, Cout):
    Wp = W + 2
    N1 = _round_up((TH + 2) * Wp + 2, 128)
    N2 = TH * Wp
    LS = _round_up(2 * Wp + 2 + N1, 128)
    b = 0
    b += 9 * Cin * N1 * 4            # col1 (f32)
    b += Cmid * N1 * 2               # hp   (bf16)
    b += 3 * Cmid * N2 * 2           # col2 (bf16)
    b += 2 * Cout * N2 * 4           # acc + res (f32)
    b += 2 * Cmid * N1 * 4           # big f32 temporaries (acc1 / h)
    b += 2 * Cin * LS * 2            # input strip block, double buffered
    b += 2 * Cout * TH * W * 4       # output block, double buffered
    b += 2 * 2 * (Cmid * 9 * Cin * 4 + 3 * Cout * 3 * Cmid * 2 + Cout * Cin * 2)
    b += 2 * N1 * 4                  # mask
    return b


def _vmem_budget_bytes():
    # Per-generation budget: ~35% of physical VMEM, capped; conservative fallback
    # (fits v5e / v6e / v7x) when the query is unavailable.
    try:
        cap = getattr(pltpu.get_tpu_info(), "vmem_capacity_bytes", None)
        if cap:
            return min(int(cap * 0.35), 48 * 1024 * 1024)
    except Exception:
        pass
    return 20 * 1024 * 1024


def _pick_row_tile(H, W, Cin, Cmid, Cout, budget):
    divs = sorted({d for d in range(1, H + 1) if H % d == 0}, reverse=True)
    for th in divs:                      # largest tile that fits the budget
        if th != H and (th * W) % 128 != 0:
            continue                     # keep the output block lane-dense
        if _estimate_vmem(th, W, Cin, Cmid, Cout) <= budget:
            return th
    for th in reversed(divs):            # nothing fits: smallest legal tile
        if th == H or (th * W) % 128 == 0:
            return th
    return H


# ----------------------------------------------------------------------------
# Wrapper
# ----------------------------------------------------------------------------
@functools.partial(jax.jit, static_argnames=("row_tile",))
def inconv_forward(x_nchw, packed, row_tile=None):
    """Matches PyTorch inconv(in_ch, out_ch).forward (eval mode).  NCHW in / out."""
    N, Cin, H, W = x_nchw.shape
    Cmid = packed["w1f"].shape[0]
    Cout = packed["w2g"].shape[1]
    assert packed["w1f"].shape[1] == 9 * Cin
    assert Cout % 8 == 0, "out_ch must be a multiple of 8 for clean TPU layout"

    TH = row_tile if row_tile is not None else _pick_row_tile(
        H, W, Cin, Cmid, Cout, _vmem_budget_bytes())
    assert H % TH == 0 and ((TH * W) % 128 == 0 or TH == H)
    nR = H // TH
    Wp = W + 2
    N1 = _round_up((TH + 2) * Wp + 2, 128)    # conv1 output pixels per tile
    N2 = TH * Wp                              # conv2 output pixels per tile
    LS = _round_up(2 * Wp + 2 + N1, 128)      # flat input-strip length

    # Zero-padded input (2 halo rows top/bottom, 2 pad cols left, stride Wp),
    # flattened and cut into overlapping per-row-tile strips.  The input is the
    # smallest tensor here (Cin=3), so this host-side prep is negligible.
    xb = x_nchw.astype(jnp.bfloat16)
    xpad = jnp.pad(xb, ((0, 0), (0, 0), (2, 2), (2, 0)))        # (N, Cin, H+4, Wp)
    xflat = xpad.reshape(N, Cin, (H + 4) * Wp)
    tail = max(0, (nR - 1) * TH * Wp + LS - (H + 4) * Wp)
    if tail:
        xflat = jnp.pad(xflat, ((0, 0), (0, 0), (0, tail)))
    strips = jnp.stack(
        [lax.slice_in_dim(xflat, r * TH * Wp, r * TH * Wp + LS, axis=2)
         for r in range(nR)], axis=1)                            # (N, nR, Cin, LS)

    # Validity mask for the flat h grid: 1.0 on real columns, 0.0 on the pad columns.
    pos = jnp.arange(N1, dtype=jnp.int32) % Wp
    mask = ((pos >= 1) & (pos <= W)).astype(jnp.float32).reshape(1, N1)

    est = _estimate_vmem(TH, W, Cin, Cmid, Cout)
    vmem_limit = int(max(32 * 1024 * 1024, 2 * est))

    kernel = functools.partial(_double_conv_kernel, TH=TH, W=W, Wp=Wp, N1=N1, N2=N2)
    out = pl.pallas_call(
        kernel,
        out_shape=jax.ShapeDtypeStruct((N, Cout, H * W), jnp.float32),
        grid=(N, nR),
        in_specs=[
            pl.BlockSpec((1, 1, Cin, LS), lambda n, r: (n, r, 0, 0)),
            pl.BlockSpec((Cmid, 9 * Cin), lambda n, r: (0, 0)),
            pl.BlockSpec((Cmid, 2), lambda n, r: (0, 0)),
            pl.BlockSpec((3, Cout, 3 * Cmid), lambda n, r: (0, 0, 0)),
            pl.BlockSpec((Cout, 2), lambda n, r: (0, 0)),
            pl.BlockSpec((Cout, Cin), lambda n, r: (0, 0)),
            pl.BlockSpec((Cout, 2), lambda n, r: (0, 0)),
            pl.BlockSpec((1, N1), lambda n, r: (0, 0)),
        ],
        out_specs=pl.BlockSpec((1, Cout, TH * W), lambda n, r: (n, 0, r)),
        scratch_shapes=[
            pltpu.VMEM((9 * Cin, N1), jnp.float32),    # conv1 im2col
            pltpu.VMEM((Cmid, N1), jnp.bfloat16),      # padded mid activation h
            pltpu.VMEM((3 * Cmid, N2), jnp.bfloat16),  # conv2 ky-group im2col
            pltpu.VMEM((Cout, N2), jnp.float32),       # conv2 accumulator
            pltpu.VMEM((Cout, N2), jnp.float32),       # residual (post-BN3)
        ],
        compiler_params=pltpu.CompilerParams(
            dimension_semantics=("parallel", "parallel"),
            vmem_limit_bytes=vmem_limit),
    )(strips, packed["w1f"], packed["sb1"], packed["w2g"], packed["sb2"],
      packed["wr"], packed["sbr"], mask)

    return out.reshape(N, Cout, H, W)          # free, contiguous reshape (NCHW)


# ----------------------------------------------------------------------------
# Parameter handling (PyTorch-layout raw params -> packed kernel params)
# ----------------------------------------------------------------------------
def _fold_bn(conv_bias, gamma, beta, mean, var, eps=1e-5):
    scale = gamma / jnp.sqrt(var + eps)
    bias = scale * (conv_bias - mean) + beta
    return jnp.stack([scale, bias], axis=1).astype(jnp.float32)   # (C, 2)


def pack_double_conv_params(raw, eps=1e-5):
    w1, w2, wr = raw["w1"], raw["w2"], raw["wr"]
    out_ch, in_ch = w1.shape[0], w1.shape[1]
    if wr is None:
        # in_ch == out_ch: PyTorch skips channel_conv -> identity residual.
        assert in_ch == out_ch
        wr = jnp.eye(out_ch, dtype=jnp.float32).reshape(out_ch, in_ch, 1, 1)
        sbr = jnp.stack([jnp.ones((out_ch,)), jnp.zeros((out_ch,))], axis=1)
        sbr = sbr.astype(jnp.float32)
    else:
        sbr = _fold_bn(jnp.zeros((out_ch,), jnp.float32),
                       raw["g3"], raw["be3"], raw["m3"], raw["v3"], eps)
    return {
        # conv1 kept in f32 (tiny K = 9*in_ch) -> avoids sub-8-row bf16 packed stores.
        "w1f": jnp.transpose(w1, (0, 2, 3, 1)).reshape(out_ch, 9 * in_ch)
               .astype(jnp.float32),
        "sb1": _fold_bn(raw["b1"], raw["g1"], raw["be1"], raw["m1"], raw["v1"], eps),
        # conv2 grouped by ky: [ky, co, kx*Cmid + cm]
        "w2g": jnp.transpose(w2, (2, 0, 3, 1)).reshape(3, out_ch, 3 * out_ch)
               .astype(jnp.bfloat16),
        "sb2": _fold_bn(raw["b2"], raw["g2"], raw["be2"], raw["m2"], raw["v2"], eps),
        "wr": wr.reshape(out_ch, in_ch).astype(jnp.bfloat16),
        "sbr": sbr,
    }


def init_raw_params(key, in_ch, out_ch):
    ks = jax.random.split(key, 8)

    def bn(k, c):
        k0, k1, k2, k3 = jax.random.split(k, 4)
        return (1.0 + 0.1 * jax.random.normal(k0, (c,), jnp.float32),
                0.1 * jax.random.normal(k1, (c,), jnp.float32),
                0.1 * jax.random.normal(k2, (c,), jnp.float32),
                1.0 + 0.1 * jax.random.uniform(k3, (c,), jnp.float32))

    w1 = 0.1 * jax.random.normal(ks[0], (out_ch, in_ch, 3, 3), jnp.float32)
    b1 = 0.1 * jax.random.normal(ks[1], (out_ch,), jnp.float32)
    g1, be1, m1, v1 = bn(ks[2], out_ch)
    w2 = 0.1 * jax.random.normal(ks[3], (out_ch, out_ch, 3, 3), jnp.float32)
    b2 = 0.1 * jax.random.normal(ks[4], (out_ch,), jnp.float32)
    g2, be2, m2, v2 = bn(ks[5], out_ch)
    wr = 0.1 * jax.random.normal(ks[6], (out_ch, in_ch, 1, 1), jnp.float32)
    g3, be3, m3, v3 = bn(ks[7], out_ch)
    return dict(w1=w1, b1=b1, g1=g1, be1=be1, m1=m1, v1=v1,
                w2=w2, b2=b2, g2=g2, be2=be2, m2=m2, v2=v2,
                wr=wr, g3=g3, be3=be3, m3=m3, v3=v3)


# ----------------------------------------------------------------------------
# Pure-JAX reference (same bf16 quantization) for the in-script sanity check
# ----------------------------------------------------------------------------
def reference_forward(x_nchw, raw, eps=1e-5):
    xb = x_nchw.astype(jnp.bfloat16)

    def conv(z, w):
        return lax.conv_general_dilated(
            z.astype(jnp.bfloat16), w.astype(jnp.bfloat16),
            window_strides=(1, 1), padding="SAME",
            dimension_numbers=("NCHW", "OIHW", "NCHW"),
            preferred_element_type=jnp.float32)

    def bn(z, cb, g, b, m, v):
        s = g / jnp.sqrt(v + eps)
        bb = s * (cb - m) + b
        return z * s[None, :, None, None] + bb[None, :, None, None]

    h = jnp.maximum(bn(conv(xb, raw["w1"]),
                       raw["b1"], raw["g1"], raw["be1"], raw["m1"], raw["v1"]), 0.0)
    y = jnp.maximum(bn(conv(h, raw["w2"]),
                       raw["b2"], raw["g2"], raw["be2"], raw["m2"], raw["v2"]), 0.0)
    zero_b = jnp.zeros((raw["wr"].shape[0],), jnp.float32)
    r = bn(conv(xb, raw["wr"]),
           zero_b, raw["g3"], raw["be3"], raw["m3"], raw["v3"])
    return y + r


if __name__ == "__main__":
    key = jax.random.PRNGKey(0)
    k_x, k_p = jax.random.split(key)

    # Small analogue of torch.rand(4, 3, 256, 256) feeding inconv(3, 64).
    # H=24 with row_tile=8 exercises first / interior / last row tiles.
    N, Cin, H, W = 2, 3, 24, 16
    Cout = 16
    x = jax.random.uniform(k_x, (N, Cin, H, W), jnp.float32)
    raw = init_raw_params(k_p, Cin, Cout)
    packed = pack_double_conv_params(raw)

    out = jax.block_until_ready(inconv_forward(x, packed, row_tile=8))
    ref = jax.block_until_ready(reference_forward(x, raw))

    assert out.shape == (N, Cout, H, W)
    assert bool(jnp.max(jnp.abs(out - ref)) < 3e-2), float(jnp.max(jnp.abs(out - ref)))
    print("KERNEL_OK")
</pallas_src>

<mosaic_0001>
module attributes {stable_mosaic.version = 11 : i64} {
  func.func @_double_conv_kernel(%arg0: i32, %arg1: i32, %arg2: memref<1x1x3x384xbf16, #tpu.memory_space<vmem>>, %arg3: memref<16x27xf32, #tpu.memory_space<vmem>>, %arg4: memref<16x2xf32, #tpu.memory_space<vmem>>, %arg5: memref<3x16x48xbf16, #tpu.memory_space<vmem>>, %arg6: memref<16x2xf32, #tpu.memory_space<vmem>>, %arg7: memref<16x3xbf16, #tpu.memory_space<vmem>>, %arg8: memref<16x2xf32, #tpu.memory_space<vmem>>, %arg9: memref<1x256xf32, #tpu.memory_space<vmem>>, %arg10: memref<1x16x128xf32, #tpu.memory_space<vmem>>, %arg11: memref<27x256xf32, #tpu.memory_space<vmem>>, %arg12: memref<16x256xbf16, #tpu.memory_space<vmem>>, %arg13: memref<48x144xbf16, #tpu.memory_space<vmem>>, %arg14: memref<16x144xf32, #tpu.memory_space<vmem>>, %arg15: memref<16x144xf32, #tpu.memory_space<vmem>>) attributes {dimension_semantics = [#tpu.dimension_semantics<parallel>, #tpu.dimension_semantics<parallel>], iteration_bounds = array<i64: 2, 3>, scalar_prefetch = 0 : i64, scratch_operands = 5 : i64, tpu.core_type = #tpu.core_type<tc>, window_params = [{transform_indices = @transform_0, window_bounds = array<i64: 1, 1, 3, 384>}, {pipeline_mode = #tpu.pipeline_mode<synchronous>, transform_indices = @transform_1, window_bounds = array<i64: 16, 27>}, {pipeline_mode = #tpu.pipeline_mode<synchronous>, transform_indices = @transform_2, window_bounds = array<i64: 16, 2>}, {pipeline_mode = #tpu.pipeline_mode<synchronous>, transform_indices = @transform_3, window_bounds = array<i64: 3, 16, 48>}, {pipeline_mode = #tpu.pipeline_mode<synchronous>, transform_indices = @transform_4, window_bounds = array<i64: 16, 2>}, {pipeline_mode = #tpu.pipeline_mode<synchronous>, transform_indices = @transform_5, window_bounds = array<i64: 16, 3>}, {pipeline_mode = #tpu.pipeline_mode<synchronous>, transform_indices = @transform_6, window_bounds = array<i64: 16, 2>}, {pipeline_mode = #tpu.pipeline_mode<synchronous>, transform_indices = @transform_7, window_bounds = array<i64: 1, 256>}, {transform_indices = @transform_8, window_bounds = array<i64: 1, 16, 128>}]} {
    %c0 = arith.constant 0 : index
    %c0_0 = arith.constant 0 : index
    %c0_1 = arith.constant 0 : index
    %c0_2 = arith.constant 0 : index
    %0 = vector.load %arg2[%c0, %c0_0, %c0_1, %c0_2] : memref<1x1x3x384xbf16, #tpu.memory_space<vmem>>, vector<1x1x3x256xbf16>
    %1 = vector.shape_cast %0 : vector<1x1x3x256xbf16> to vector<3x256xbf16>
    %2 = arith.extf %1 : vector<3x256xbf16> to vector<3x256xf32>
    %c0_3 = arith.constant 0 : index
    %c0_4 = arith.constant 0 : index
    %3 = vector.load %arg11[%c0_3, %c0_4] : memref<27x256xf32, #tpu.memory_space<vmem>>, vector<3x256xf32>
    tpu.vector_store %arg11[%c0_3, %c0_4], %2 {strides = array<i32>} : memref<27x256xf32, #tpu.memory_space<vmem>>, vector<3x256xf32>,
    %c0_5 = arith.constant 0 : index
    %c0_6 = arith.constant 0 : index
    %c0_7 = arith.constant 0 : index
    %c1 = arith.constant 1 : index
    %4 = vector.load %arg2[%c0_5, %c0_6, %c0_7, %c1] : memref<1x1x3x384xbf16, #tpu.memory_space<vmem>>, vector<1x1x3x256xbf16>
    %5 = vector.shape_cast %4 : vector<1x1x3x256xbf16> to vector<3x256xbf16>
    %6 = arith.extf %5 : vector<3x256xbf16> to vector<3x256xf32>
    %c3 = arith.constant 3 : index
    %c0_8 = arith.constant 0 : index
    %7 = vector.load %arg11[%c3, %c0_8] : memref<27x256xf32, #tpu.memory_space<vmem>>, vector<3x256xf32>
    tpu.vector_store %arg11[%c3, %c0_8], %6 {strides = array<i32>} : memref<27x256xf32, #tpu.memory_space<vmem>>, vector<3x256xf32>,
    %c0_9 = arith.constant 0 : index
    %c0_10 = arith.constant 0 : index
    %c0_11 = arith.constant 0 : index
    %c2 = arith.constant 2 : index
    %8 = vector.load %arg2[%c0_9, %c0_10, %c0_11, %c2] : memref<1x1x3x384xbf16, #tpu.memory_space<vmem>>, vector<1x1x3x256xbf16>
    %9 = vector.shape_cast %8 : vector<1x1x3x256xbf16> to vector<3x256xbf16>
    %10 = arith.extf %9 : vector<3x256xbf16> to vector<3x256xf32>
    %c6 = arith.constant 6 : index
    %c0_12 = arith.constant 0 : index
    %11 = vector.load %arg11[%c6, %c0_12] : memref<27x256xf32, #tpu.memory_space<vmem>>, vector<3x256xf32>
    tpu.vector_store %arg11[%c6, %c0_12], %10 {strides = array<i32>} : memref<27x256xf32, #tpu.memory_space<vmem>>, vector<3x256xf32>,
    %c0_13 = arith.constant 0 : index
    %c0_14 = arith.constant 0 : index
    %c0_15 = arith.constant 0 : index
    %c18 = arith.constant 18 : index
    %12 = vector.load %arg2[%c0_13, %c0_14, %c0_15, %c18] : memref<1x1x3x384xbf16, #tpu.memory_space<vmem>>, vector<1x1x3x256xbf16>
    %13 = vector.shape_cast %12 : vector<1x1x3x256xbf16> to vector<3x256xbf16>
    %14 = arith.extf %13 : vector<3x256xbf16> to vector<3x256xf32>
    %c9 = arith.constant 9 : index
    %c0_16 = arith.constant 0 : index
    %15 = vector.load %arg11[%c9, %c0_16] : memref<27x256xf32, #tpu.memory_space<vmem>>, vector<3x256xf32>
    tpu.vector_store %arg11[%c9, %c0_16], %14 {strides = array<i32>} : memref<27x256xf32, #tpu.memory_space<vmem>>, vector<3x256xf32>,
    %c0_17 = arith.constant 0 : index
    %c0_18 = arith.constant 0 : index
    %c0_19 = arith.constant 0 : index
    %c19 = arith.constant 19 : index
    %16 = vector.load %arg2[%c0_17, %c0_18, %c0_19, %c19] : memref<1x1x3x384xbf16, #tpu.memory_space<vmem>>, vector<1x1x3x256xbf16>
    %17 = vector.shape_cast %16 : vector<1x1x3x256xbf16> to vector<3x256xbf16>
    %18 = arith.extf %17 : vector<3x256xbf16> to vector<3x256xf32>
    %c12 = arith.constant 12 : index
    %c0_20 = arith.constant 0 : index
    %19 = vector.load %arg11[%c12, %c0_20] : memref<27x256xf32, #tpu.memory_space<vmem>>, vector<3x256xf32>
    tpu.vector_store %arg11[%c12, %c0_20], %18 {strides = array<i32>} : memref<27x256xf32, #tpu.memory_space<vmem>>, vector<3x256xf32>,
    %c0_21 = arith.constant 0 : index
    %c0_22 = arith.constant 0 : index
    %c0_23 = arith.constant 0 : index
    %c20 = arith.constant 20 : index
    %20 = vector.load %arg2[%c0_21, %c0_22, %c0_23, %c20] : memref<1x1x3x384xbf16, #tpu.memory_space<vmem>>, vector<1x1x3x256xbf16>
    %21 = vector.shape_cast %20 : vector<1x1x3x256xbf16> to vector<3x256xbf16>
    %22 = arith.extf %21 : vector<3x256xbf16> to vector<3x256xf32>
    %c15 = arith.constant 15 : index
    %c0_24 = arith.constant 0 : index
    %23 = vector.load %arg11[%c15, %c0_24] : memref<27x256xf32, #tpu.memory_space<vmem>>, vector<3x256xf32>
    tpu.vector_store %arg11[%c15, %c0_24], %22 {strides = array<i32>} : memref<27x256xf32, #tpu.memory_space<vmem>>, vector<3x256xf32>,
    %c0_25 = arith.constant 0 : index
    %c0_26 = arith.constant 0 : index
    %c0_27 = arith.constant 0 : index
    %c36 = arith.constant 36 : index
    %24 = vector.load %arg2[%c0_25, %c0_26, %c0_27, %c36] : memref<1x1x3x384xbf16, #tpu.memory_space<vmem>>, vector<1x1x3x256xbf16>
    %25 = vector.shape_cast %24 : vector<1x1x3x256xbf16> to vector<3x256xbf16>
    %26 = arith.extf %25 : vector<3x256xbf16> to vector<3x256xf32>
    %c18_28 = arith.constant 18 : index
    %c0_29 = arith.constant 0 : index
    %27 = vector.load %arg11[%c18_28, %c0_29] : memref<27x256xf32, #tpu.memory_space<vmem>>, vector<3x256xf32>
    tpu.vector_store %arg11[%c18_28, %c0_29], %26 {strides = array<i32>} : memref<27x256xf32, #tpu.memory_space<vmem>>, vector<3x256xf32>,
    %c0_30 = arith.constant 0 : index
    %c0_31 = arith.constant 0 : index
    %c0_32 = arith.constant 0 : index
    %c37 = arith.constant 37 : index
    %28 = vector.load %arg2[%c0_30, %c0_31, %c0_32, %c37] : memref<1x1x3x384xbf16, #tpu.memory_space<vmem>>, vector<1x1x3x256xbf16>
    %29 = vector.shape_cast %28 : vector<1x1x3x256xbf16> to vector<3x256xbf16>
    %30 = arith.extf %29 : vector<3x256xbf16> to vector<3x256xf32>
    %c21 = arith.constant 21 : index
    %c0_33 = arith.constant 0 : index
    %31 = vector.load %arg11[%c21, %c0_33] : memref<27x256xf32, #tpu.memory_space<vmem>>, vector<3x256xf32>
    tpu.vector_store %arg11[%c21, %c0_33], %30 {strides = array<i32>} : memref<27x256xf32, #tpu.memory_space<vmem>>, vector<3x256xf32>,
    %c0_34 = arith.constant 0 : index
    %c0_35 = arith.constant 0 : index
    %c0_36 = arith.constant 0 : index
    %c38 = arith.constant 38 : index
    %32 = vector.load %arg2[%c0_34, %c0_35, %c0_36, %c38] : memref<1x1x3x384xbf16, #tpu.memory_space<vmem>>, vector<1x1x3x256xbf16>
    %33 = vector.shape_cast %32 : vector<1x1x3x256xbf16> to vector<3x256xbf16>
    %34 = arith.extf %33 : vector<3x256xbf16> to vector<3x256xf32>
    %c24 = arith.constant 24 : index
    %c0_37 = arith.constant 0 : index
    %35 = vector.load %arg11[%c24, %c0_37] : memref<27x256xf32, #tpu.memory_space<vmem>>, vector<3x256xf32>
    tpu.vector_store %arg11[%c24, %c0_37], %34 {strides = array<i32>} : memref<27x256xf32, #tpu.memory_space<vmem>>, vector<3x256xf32>,
    %c0_38 = arith.constant 0 : index
    %c0_39 = arith.constant 0 : index
    %36 = vector.load %arg3[%c0_38, %c0_39] : memref<16x27xf32, #tpu.memory_space<vmem>>, vector<16x27xf32>
    %c0_40 = arith.constant 0 : index
    %c0_41 = arith.constant 0 : index
    %37 = vector.load %arg11[%c0_40, %c0_41] : memref<27x256xf32, #tpu.memory_space<vmem>>, vector<27x256xf32>
    %cst = arith.constant dense<0.000000e+00> : vector<16x256xf32>
    %38 = tpu.matmul %36, %37, %cst {dimension_numbers = #tpu.dot_dimension_numbers<[1], [0], [0], [1], [0, 0, 1, 1], [], []>} : vector<16x27xf32>, vector<27x256xf32>, vector<16x256xf32> -> vector<16x256xf32>
    %c0_42 = arith.constant 0 : index
    %c0_43 = arith.constant 0 : index
    %39 = vector.load %arg4[%c0_42, %c0_43] : memref<16x2xf32, #tpu.memory_space<vmem>>, vector<16x1xf32>
    %c0_44 = arith.constant 0 : index
    %c1_45 = arith.constant 1 : index
    %40 = vector.load %arg4[%c0_44, %c1_45] : memref<16x2xf32, #tpu.memory_space<vmem>>, vector<16x1xf32>
    %41 = vector.broadcast %39 : vector<16x1xf32> to vector<16x256xf32>
    %42 = arith.mulf %38, %41 : vector<16x256xf32>
    %43 = vector.broadcast %40 : vector<16x1xf32> to vector<16x256xf32>
    %44 = arith.addf %42, %43 : vector<16x256xf32>
    %cst_46 = arith.constant 0.000000e+00 : f32
    %45 = vector.broadcast %cst_46 : f32 to vector<16x256xf32>
    %46 = arith.maximumf %44, %45 : vector<16x256xf32>
    %c0_47 = arith.constant 0 : index
    %c0_48 = arith.constant 0 : index
    %47 = vector.load %arg9[%c0_47, %c0_48] : memref<1x256xf32, #tpu.memory_space<vmem>>, vector<1x256xf32>
    %48 = vector.broadcast %47 : vector<1x256xf32> to vector<16x256xf32>
    %49 = arith.mulf %46, %48 : vector<16x256xf32>
    %50 = arith.truncf %49 : vector<16x256xf32> to vector<16x256xbf16>
    %c0_49 = arith.constant 0 : index
    %c0_50 = arith.constant 0 : index
    %51 = vector.load %arg12[%c0_49, %c0_50] : memref<16x256xbf16, #tpu.memory_space<vmem>>, vector<16x256xbf16>
    tpu.vector_store %arg12[%c0_49, %c0_50], %50 {strides = array<i32>} : memref<16x256xbf16, #tpu.memory_space<vmem>>, vector<16x256xbf16>,
    %c0_i32 = arith.constant 0 : i32
    %52 = arith.cmpi eq, %arg1, %c0_i32 : i32
    %53 = arith.extui %52 : i1 to i32
    %c0_i32_51 = arith.constant 0 : i32
    %54 = arith.cmpi ne, %53, %c0_i32_51 : i32
    scf.if %54 {
      %cst_186 = arith.constant 0.000000e+00 : bf16
      %204 = vector.broadcast %cst_186 : bf16 to vector<16x18xbf16>
      %c0_187 = arith.constant 0 : index
      %c0_188 = arith.constant 0 : index
      %205 = vector.load %arg12[%c0_187, %c0_188] : memref<16x256xbf16, #tpu.memory_space<vmem>>, vector<16x18xbf16>
      tpu.vector_store %arg12[%c0_187, %c0_188], %204 {strides = array<i32>} : memref<16x256xbf16, #tpu.memory_space<vmem>>, vector<16x18xbf16>,
    } else {
    }
    %c2_i32 = arith.constant 2 : i32
    %55 = arith.cmpi eq, %arg1, %c2_i32 : i32
    %56 = arith.extui %55 : i1 to i32
    %c0_i32_52 = arith.constant 0 : i32
    %57 = arith.cmpi ne, %56, %c0_i32_52 : i32
    scf.if %57 {
      %cst_186 = arith.constant 0.000000e+00 : bf16
      %204 = vector.broadcast %cst_186 : bf16 to vector<16x18xbf16>
      %c0_187 = arith.constant 0 : index
      %c162 = arith.constant 162 : index
      %205 = vector.load %arg12[%c0_187, %c162] : memref<16x256xbf16, #tpu.memory_space<vmem>>, vector<16x18xbf16>
      tpu.vector_store %arg12[%c0_187, %c162], %204 {strides = array<i32>} : memref<16x256xbf16, #tpu.memory_space<vmem>>, vector<16x18xbf16>,
    } else {
    }
    %c0_53 = arith.constant 0 : index
    %c0_54 = arith.constant 0 : index
    %58 = vector.load %arg12[%c0_53, %c0_54] : memref<16x256xbf16, #tpu.memory_space<vmem>>, vector<16x144xbf16>
    %c0_55 = arith.constant 0 : index
    %c0_56 = arith.constant 0 : index
    %59 = vector.load %arg13[%c0_55, %c0_56] : memref<48x144xbf16, #tpu.memory_space<vmem>>, vector<16x144xbf16>
    tpu.vector_store %arg13[%c0_55, %c0_56], %58 {strides = array<i32>} : memref<48x144xbf16, #tpu.memory_space<vmem>>, vector<16x144xbf16>,
    %c0_57 = arith.constant 0 : index
    %c1_58 = arith.constant 1 : index
    %60 = vector.load %arg12[%c0_57, %c1_58] : memref<16x256xbf16, #tpu.memory_space<vmem>>, vector<16x144xbf16>
    %c16 = arith.constant 16 : index
    %c0_59 = arith.constant 0 : index
    %61 = vector.load %arg13[%c16, %c0_59] : memref<48x144xbf16, #tpu.memory_space<vmem>>, vector<16x144xbf16>
    tpu.vector_store %arg13[%c16, %c0_59], %60 {strides = array<i32>} : memref<48x144xbf16, #tpu.memory_space<vmem>>, vector<16x144xbf16>,
    %c0_60 = arith.constant 0 : index
    %c2_61 = arith.constant 2 : index
    %62 = vector.load %arg12[%c0_60, %c2_61] : memref<16x256xbf16, #tpu.memory_space<vmem>>, vector<16x144xbf16>
    %c32 = arith.constant 32 : index
    %c0_62 = arith.constant 0 : index
    %63 = vector.load %arg13[%c32, %c0_62] : memref<48x144xbf16, #tpu.memory_space<vmem>>, vector<16x144xbf16>
    tpu.vector_store %arg13[%c32, %c0_62], %62 {strides = array<i32>} : memref<48x144xbf16, #tpu.memory_space<vmem>>, vector<16x144xbf16>,
    %c0_63 = arith.constant 0 : index
    %c0_64 = arith.constant 0 : index
    %c0_65 = arith.constant 0 : index
    %64 = vector.load %arg5[%c0_63, %c0_64, %c0_65] : memref<3x16x48xbf16, #tpu.memory_space<vmem>>, vector<1x16x48xbf16>
    %65 = vector.shape_cast %64 : vector<1x16x48xbf16> to vector<16x48xbf16>
    %c0_66 = arith.constant 0 : index
    %c0_67 = arith.constant 0 : index
    %66 = vector.load %arg13[%c0_66, %c0_67] : memref<48x144xbf16, #tpu.memory_space<vmem>>, vector<48x144xbf16>
    %cst_68 = arith.constant dense<0.000000e+00> : vector<16x144xf32>
    %67 = tpu.matmul %65, %66, %cst_68 {dimension_numbers = #tpu.dot_dimension_numbers<[1], [0], [0], [1], [0, 0, 1, 1], [], []>} : vector<16x48xbf16>, vector<48x144xbf16>, vector<16x144xf32> -> vector<16x144xf32>
    %c0_69 = arith.constant 0 : index
    %c0_70 = arith.constant 0 : index
    %68 = vector.load %arg14[%c0_69, %c0_70] : memref<16x144xf32, #tpu.memory_space<vmem>>, vector<16x144xf32>
    tpu.vector_store %arg14[%c0_69, %c0_70], %67 {strides = array<i32>} : memref<16x144xf32, #tpu.memory_space<vmem>>, vector<16x144xf32>,
    %c0_71 = arith.constant 0 : index
    %c18_72 = arith.constant 18 : index
    %69 = vector.load %arg12[%c0_71, %c18_72] : memref<16x256xbf16, #tpu.memory_space<vmem>>, vector<16x144xbf16>
    %c0_73 = arith.constant 0 : index
    %c0_74 = arith.constant 0 : index
    %70 = vector.load %arg13[%c0_73, %c0_74] : memref<48x144xbf16, #tpu.memory_space<vmem>>, vector<16x144xbf16>
    tpu.vector_store %arg13[%c0_73, %c0_74], %69 {strides = array<i32>} : memref<48x144xbf16, #tpu.memory_space<vmem>>, vector<16x144xbf16>,
    %c0_75 = arith.constant 0 : index
    %c19_76 = arith.constant 19 : index
    %71 = vector.load %arg12[%c0_75, %c19_76] : memref<16x256xbf16, #tpu.memory_space<vmem>>, vector<16x144xbf16>
    %c16_77 = arith.constant 16 : index
    %c0_78 = arith.constant 0 : index
    %72 = vector.load %arg13[%c16_77, %c0_78] : memref<48x144xbf16, #tpu.memory_space<vmem>>, vector<16x144xbf16>
    tpu.vector_store %arg13[%c16_77, %c0_78], %71 {strides = array<i32>} : memref<48x144xbf16, #tpu.memory_space<vmem>>, vector<16x144xbf16>,
    %c0_79 = arith.constant 0 : index
    %c20_80 = arith.constant 20 : index
    %73 = vector.load %arg12[%c0_79, %c20_80] : memref<16x256xbf16, #tpu.memory_space<vmem>>, vector<16x144xbf16>
    %c32_81 = arith.constant 32 : index
    %c0_82 = arith.constant 0 : index
    %74 = vector.load %arg13[%c32_81, %c0_82] : memref<48x144xbf16, #tpu.memory_space<vmem>>, vector<16x144xbf16>
    tpu.vector_store %arg13[%c32_81, %c0_82], %73 {strides = array<i32>} : memref<48x144xbf16, #tpu.memory_space<vmem>>, vector<16x144xbf16>,
    %c1_83 = arith.constant 1 : index
    %c0_84 = arith.constant 0 : index
    %c0_85 = arith.constant 0 : index
    %75 = vector.load %arg5[%c1_83, %c0_84, %c0_85] : memref<3x16x48xbf16, #tpu.memory_space<vmem>>, vector<1x16x48xbf16>
    %76 = vector.shape_cast %75 : vector<1x16x48xbf16> to vector<16x48xbf16>
    %c0_86 = arith.constant 0 : index
    %c0_87 = arith.constant 0 : index
    %77 = vector.load %arg13[%c0_86, %c0_87] : memref<48x144xbf16, #tpu.memory_space<vmem>>, vector<48x144xbf16>
    %cst_88 = arith.constant dense<0.000000e+00> : vector<16x144xf32>
    %78 = tpu.matmul %76, %77, %cst_88 {dimension_numbers = #tpu.dot_dimension_numbers<[1], [0], [0], [1], [0, 0, 1, 1], [], []>} : vector<16x48xbf16>, vector<48x144xbf16>, vector<16x144xf32> -> vector<16x144xf32>
    %c0_89 = arith.constant 0 : index
    %c0_90 = arith.constant 0 : index
    %79 = vector.load %arg14[%c0_89, %c0_90] : memref<16x144xf32, #tpu.memory_space<vmem>>, vector<16x144xf32>
    %80 = arith.addf %79, %78 : vector<16x144xf32>
    %c0_91 = arith.constant 0 : index
    %c0_92 = arith.constant 0 : index
    %81 = vector.load %arg14[%c0_91, %c0_92] : memref<16x144xf32, #tpu.memory_space<vmem>>, vector<16x144xf32>
    tpu.vector_store %arg14[%c0_91, %c0_92], %80 {strides = array<i32>} : memref<16x144xf32, #tpu.memory_space<vmem>>, vector<16x144xf32>,
    %c0_93 = arith.constant 0 : index
    %c36_94 = arith.constant 36 : index
    %82 = vector.load %arg12[%c0_93, %c36_94] : memref<16x256xbf16, #tpu.memory_space<vmem>>, vector<16x144xbf16>
    %c0_95 = arith.constant 0 : index
    %c0_96 = arith.constant 0 : index
    %83 = vector.load %arg13[%c0_95, %c0_96] : memref<48x144xbf16, #tpu.memory_space<vmem>>, vector<16x144xbf16>
    tpu.vector_store %arg13[%c0_95, %c0_96], %82 {strides = array<i32>} : memref<48x144xbf16, #tpu.memory_space<vmem>>, vector<16x144xbf16>,
    %c0_97 = arith.constant 0 : index
    %c37_98 = arith.constant 37 : index
    %84 = vector.load %arg12[%c0_97, %c37_98] : memref<16x256xbf16, #tpu.memory_space<vmem>>, vector<16x144xbf16>
    %c16_99 = arith.constant 16 : index
    %c0_100 = arith.constant 0 : index
    %85 = vector.load %arg13[%c16_99, %c0_100] : memref<48x144xbf16, #tpu.memory_space<vmem>>, vector<16x144xbf16>
    tpu.vector_store %arg13[%c16_99, %c0_100], %84 {strides = array<i32>} : memref<48x144xbf16, #tpu.memory_space<vmem>>, vector<16x144xbf16>,
    %c0_101 = arith.constant 0 : index
    %c38_102 = arith.constant 38 : index
    %86 = vector.load %arg12[%c0_101, %c38_102] : memref<16x256xbf16, #tpu.memory_space<vmem>>, vector<16x144xbf16>
    %c32_103 = arith.constant 32 : index
    %c0_104 = arith.constant 0 : index
    %87 = vector.load %arg13[%c32_103, %c0_104] : memref<48x144xbf16, #tpu.memory_space<vmem>>, vector<16x144xbf16>
    tpu.vector_store %arg13[%c32_103, %c0_104], %86 {strides = array<i32>} : memref<48x144xbf16, #tpu.memory_space<vmem>>, vector<16x144xbf16>,
    %c2_105 = arith.constant 2 : index
    %c0_106 = arith.constant 0 : index
    %c0_107 = arith.constant 0 : index
    %88 = vector.load %arg5[%c2_105, %c0_106, %c0_107] : memref<3x16x48xbf16, #tpu.memory_space<vmem>>, vector<1x16x48xbf16>
    %89 = vector.shape_cast %88 : vector<1x16x48xbf16> to vector<16x48xbf16>
    %c0_108 = arith.constant 0 : index
    %c0_109 = arith.constant 0 : index
    %90 = vector.load %arg13[%c0_108, %c0_109] : memref<48x144xbf16, #tpu.memory_space<vmem>>, vector<48x144xbf16>
    %cst_110 = arith.constant dense<0.000000e+00> : vector<16x144xf32>
    %91 = tpu.matmul %89, %90, %cst_110 {dimension_numbers = #tpu.dot_dimension_numbers<[1], [0], [0], [1], [0, 0, 1, 1], [], []>} : vector<16x48xbf16>, vector<48x144xbf16>, vector<16x144xf32> -> vector<16x144xf32>
    %c0_111 = arith.constant 0 : index
    %c0_112 = arith.constant 0 : index
    %92 = vector.load %arg14[%c0_111, %c0_112] : memref<16x144xf32, #tpu.memory_space<vmem>>, vector<16x144xf32>
    %93 = arith.addf %92, %91 : vector<16x144xf32>
    %c0_113 = arith.constant 0 : index
    %c0_114 = arith.constant 0 : index
    %94 = vector.load %arg14[%c0_113, %c0_114] : memref<16x144xf32, #tpu.memory_space<vmem>>, vector<16x144xf32>
    tpu.vector_store %arg14[%c0_113, %c0_114], %93 {strides = array<i32>} : memref<16x144xf32, #tpu.memory_space<vmem>>, vector<16x144xf32>,
    %c0_115 = arith.constant 0 : index
    %c0_116 = arith.constant 0 : index
    %95 = vector.load %arg7[%c0_115, %c0_116] : memref<16x3xbf16, #tpu.memory_space<vmem>>, vector<16x3xbf16>
    %c0_117 = arith.constant 0 : index
    %c0_118 = arith.constant 0 : index
    %c0_119 = arith.constant 0 : index
    %c38_120 = arith.constant 38 : index
    %96 = vector.load %arg2[%c0_117, %c0_118, %c0_119, %c38_120] : memref<1x1x3x384xbf16, #tpu.memory_space<vmem>>, vector<1x1x3x144xbf16>
    %97 = vector.shape_cast %96 : vector<1x1x3x144xbf16> to vector<3x144xbf16>
    %cst_121 = arith.constant dense<0.000000e+00> : vector<16x144xf32>
    %98 = tpu.matmul %95, %97, %cst_121 {dimension_numbers = #tpu.dot_dimension_numbers<[1], [0], [0], [1], [0, 0, 1, 1], [], []>} : vector<16x3xbf16>, vector<3x144xbf16>, vector<16x144xf32> -> vector<16x144xf32>
    %c0_122 = arith.constant 0 : index
    %c0_123 = arith.constant 0 : index
    %99 = vector.load %arg8[%c0_122, %c0_123] : memref<16x2xf32, #tpu.memory_space<vmem>>, vector<16x1xf32>
    %100 = vector.broadcast %99 : vector<16x1xf32> to vector<16x144xf32>
    %101 = arith.mulf %98, %100 : vector<16x144xf32>
    %c0_124 = arith.constant 0 : index
    %c1_125 = arith.constant 1 : index
    %102 = vector.load %arg8[%c0_124, %c1_125] : memref<16x2xf32, #tpu.memory_space<vmem>>, vector<16x1xf32>
    %103 = vector.broadcast %102 : vector<16x1xf32> to vector<16x144xf32>
    %104 = arith.addf %101, %103 : vector<16x144xf32>
    %c0_126 = arith.constant 0 : index
    %c0_127 = arith.constant 0 : index
    %105 = vector.load %arg15[%c0_126, %c0_127] : memref<16x144xf32, #tpu.memory_space<vmem>>, vector<16x144xf32>
    tpu.vector_store %arg15[%c0_126, %c0_127], %104 {strides = array<i32>} : memref<16x144xf32, #tpu.memory_space<vmem>>, vector<16x144xf32>,
    %c0_128 = arith.constant 0 : index
    %c0_129 = arith.constant 0 : index
    %106 = vector.load %arg6[%c0_128, %c0_129] : memref<16x2xf32, #tpu.memory_space<vmem>>, vector<16x1xf32>
    %c0_130 = arith.constant 0 : index
    %c1_131 = arith.constant 1 : index
    %107 = vector.load %arg6[%c0_130, %c1_131] : memref<16x2xf32, #tpu.memory_space<vmem>>, vector<16x1xf32>
    %c0_132 = arith.constant 0 : index
    %c0_133 = arith.constant 0 : index
    %108 = vector.load %arg14[%c0_132, %c0_133] : memref<16x144xf32, #tpu.memory_space<vmem>>, vector<16x16xf32>
    %109 = vector.broadcast %106 : vector<16x1xf32> to vector<16x16xf32>
    %110 = arith.mulf %108, %109 : vector<16x16xf32>
    %111 = vector.broadcast %107 : vector<16x1xf32> to vector<16x16xf32>
    %112 = arith.addf %110, %111 : vector<16x16xf32>
    %cst_134 = arith.constant 0.000000e+00 : f32
    %113 = vector.broadcast %cst_134 : f32 to vector<16x16xf32>
    %114 = arith.maximumf %112, %113 : vector<16x16xf32>
    %c0_135 = arith.constant 0 : index
    %c0_136 = arith.constant 0 : index
    %115 = vector.load %arg15[%c0_135, %c0_136] : memref<16x144xf32, #tpu.memory_space<vmem>>, vector<16x16xf32>
    %116 = arith.addf %114, %115 : vector<16x16xf32>
    %c0_137 = arith.constant 0 : index
    %c0_138 = arith.constant 0 : index
    %c0_139 = arith.constant 0 : index
    %117 = vector.load %arg10[%c0_137, %c0_138, %c0_139] : memref<1x16x128xf32, #tpu.memory_space<vmem>>, vector<1x16x16xf32>
    %118 = vector.shape_cast %117 : vector<1x16x16xf32> to vector<16x16xf32>
    %119 = vector.shape_cast %116 : vector<16x16xf32> to vector<1x16x16xf32>
    tpu.vector_store %arg10[%c0_137, %c0_138, %c0_139], %119 {strides = array<i32>} : memref<1x16x128xf32, #tpu.memory_space<vmem>>, vector<1x16x16xf32>,
    %c0_140 = arith.constant 0 : index
    %c18_141 = arith.constant 18 : index
    %120 = vector.load %arg14[%c0_140, %c18_141] : memref<16x144xf32, #tpu.memory_space<vmem>>, vector<16x16xf32>
    %121 = vector.broadcast %106 : vector<16x1xf32> to vector<16x16xf32>
    %122 = arith.mulf %120, %121 : vector<16x16xf32>
    %123 = vector.broadcast %107 : vector<16x1xf32> to vector<16x16xf32>
    %124 = arith.addf %122, %123 : vector<16x16xf32>
    %cst_142 = arith.constant 0.000000e+00 : f32
    %125 = vector.broadcast %cst_142 : f32 to vector<16x16xf32>
    %126 = arith.maximumf %124, %125 : vector<16x16xf32>
    %c0_143 = arith.constant 0 : index
    %c18_144 = arith.constant 18 : index
    %127 = vector.load %arg15[%c0_143, %c18_144] : memref<16x144xf32, #tpu.memory_space<vmem>>, vector<16x16xf32>
    %128 = arith.addf %126, %127 : vector<16x16xf32>
    %c0_145 = arith.constant 0 : index
    %c0_146 = arith.constant 0 : index
    %c16_147 = arith.constant 16 : index
    %129 = vector.load %arg10[%c0_145, %c0_146, %c16_147] : memref<1x16x128xf32, #tpu.memory_space<vmem>>, vector<1x16x16xf32>
    %130 = vector.shape_cast %129 : vector<1x16x16xf32> to vector<16x16xf32>
    %131 = vector.shape_cast %128 : vector<16x16xf32> to vector<1x16x16xf32>
    tpu.vector_store %arg10[%c0_145, %c0_146, %c16_147], %131 {strides = array<i32>} : memref<1x16x128xf32, #tpu.memory_space<vmem>>, vector<1x16x16xf32>,
    %c0_148 = arith.constant 0 : index
    %c36_149 = arith.constant 36 : index
    %132 = vector.load %arg14[%c0_148, %c36_149] : memref<16x144xf32, #tpu.memory_space<vmem>>, vector<16x16xf32>
    %133 = vector.broadcast %106 : vector<16x1xf32> to vector<16x16xf32>
    %134 = arith.mulf %132, %133 : vector<16x16xf32>
    %135 = vector.broadcast %107 : vector<16x1xf32> to vector<16x16xf32>
    %136 = arith.addf %134, %135 : vector<16x16xf32>
    %cst_150 = arith.constant 0.000000e+00 : f32
    %137 = vector.broadcast %cst_150 : f32 to vector<16x16xf32>
    %138 = arith.maximumf %136, %137 : vector<16x16xf32>
    %c0_151 = arith.constant 0 : index
    %c36_152 = arith.constant 36 : index
    %139 = vector.load %arg15[%c0_151, %c36_152] : memref<16x144xf32, #tpu.memory_space<vmem>>, vector<16x16xf32>
    %140 = arith.addf %138, %139 : vector<16x16xf32>
    %c0_153 = arith.constant 0 : index
    %c0_154 = arith.constant 0 : index
    %c32_155 = arith.constant 32 : index
    %141 = vector.load %arg10[%c0_153, %c0_154, %c32_155] : memref<1x16x128xf32, #tpu.memory_space<vmem>>, vector<1x16x16xf32>
    %142 = vector.shape_cast %141 : vector<1x16x16xf32> to vector<16x16xf32>
    %143 = vector.shape_cast %140 : vector<16x16xf32> to vector<1x16x16xf32>
    tpu.vector_store %arg10[%c0_153, %c0_154, %c32_155], %143 {strides = array<i32>} : memref<1x16x128xf32, #tpu.memory_space<vmem>>, vector<1x16x16xf32>,
    %c0_156 = arith.constant 0 : index
    %c54 = arith.constant 54 : index
    %144 = vector.load %arg14[%c0_156, %c54] : memref<16x144xf32, #tpu.memory_space<vmem>>, vector<16x16xf32>
    %145 = vector.broadcast %106 : vector<16x1xf32> to vector<16x16xf32>
    %146 = arith.mulf %144, %145 : vector<16x16xf32>
    %147 = vector.broadcast %107 : vector<16x1xf32> to vector<16x16xf32>
    %148 = arith.addf %146, %147 : vector<16x16xf32>
    %cst_157 = arith.constant 0.000000e+00 : f32
    %149 = vector.broadcast %cst_157 : f32 to vector<16x16xf32>
    %150 = arith.maximumf %148, %149 : vector<16x16xf32>
    %c0_158 = arith.constant 0 : index
    %c54_159 = arith.constant 54 : index
    %151 = vector.load %arg15[%c0_158, %c54_159] : memref<16x144xf32, #tpu.memory_space<vmem>>, vector<16x16xf32>
    %152 = arith.addf %150, %151 : vector<16x16xf32>
    %c0_160 = arith.constant 0 : index
    %c0_161 = arith.constant 0 : index
    %c48 = arith.constant 48 : index
    %153 = vector.load %arg10[%c0_160, %c0_161, %c48] : memref<1x16x128xf32, #tpu.memory_space<vmem>>, vector<1x16x16xf32>
    %154 = vector.shape_cast %153 : vector<1x16x16xf32> to vector<16x16xf32>
    %155 = vector.shape_cast %152 : vector<16x16xf32> to vector<1x16x16xf32>
    tpu.vector_store %arg10[%c0_160, %c0_161, %c48], %155 {strides = array<i32>} : memref<1x16x128xf32, #tpu.memory_space<vmem>>, vector<1x16x16xf32>,
    %c0_162 = arith.constant 0 : index
    %c72 = arith.constant 72 : index
    %156 = vector.load %arg14[%c0_162, %c72] : memref<16x144xf32, #tpu.memory_space<vmem>>, vector<16x16xf32>
    %157 = vector.broadcast %106 : vector<16x1xf32> to vector<16x16xf32>
    %158 = arith.mulf %156, %157 : vector<16x16xf32>
    %159 = vector.broadcast %107 : vector<16x1xf32> to vector<16x16xf32>
    %160 = arith.addf %158, %159 : vector<16x16xf32>
    %cst_163 = arith.constant 0.000000e+00 : f32
    %161 = vector.broadcast %cst_163 : f32 to vector<16x16xf32>
    %162 = arith.maximumf %160, %161 : vector<16x16xf32>
    %c0_164 = arith.constant 0 : index
    %c72_165 = arith.constant 72 : index
    %163 = vector.load %arg15[%c0_164, %c72_165] : memref<16x144xf32, #tpu.memory_space<vmem>>, vector<16x16xf32>
    %164 = arith.addf %162, %163 : vector<16x16xf32>
    %c0_166 = arith.constant 0 : index
    %c0_167 = arith.constant 0 : index
    %c64 = arith.constant 64 : index
    %165 = vector.load %arg10[%c0_166, %c0_167, %c64] : memref<1x16x128xf32, #tpu.memory_space<vmem>>, vector<1x16x16xf32>
    %166 = vector.shape_cast %165 : vector<1x16x16xf32> to vector<16x16xf32>
    %167 = vector.shape_cast %164 : vector<16x16xf32> to vector<1x16x16xf32>
    tpu.vector_store %arg10[%c0_166, %c0_167, %c64], %167 {strides = array<i32>} : memref<1x16x128xf32, #tpu.memory_space<vmem>>, vector<1x16x16xf32>,
    %c0_168 = arith.constant 0 : index
    %c90 = arith.constant 90 : index
    %168 = vector.load %arg14[%c0_168, %c90] : memref<16x144xf32, #tpu.memory_space<vmem>>, vector<16x16xf32>
    %169 = vector.broadcast %106 : vector<16x1xf32> to vector<16x16xf32>
    %170 = arith.mulf %168, %169 : vector<16x16xf32>
    %171 = vector.broadcast %107 : vector<16x1xf32> to vector<16x16xf32>
    %172 = arith.addf %170, %171 : vector<16x16xf32>
    %cst_169 = arith.constant 0.000000e+00 : f32
    %173 = vector.broadcast %cst_169 : f32 to vector<16x16xf32>
    %174 = arith.maximumf %172, %173 : vector<16x16xf32>
    %c0_170 = arith.constant 0 : index
    %c90_171 = arith.constant 90 : index
    %175 = vector.load %arg15[%c0_170, %c90_171] : memref<16x144xf32, #tpu.memory_space<vmem>>, vector<16x16xf32>
    %176 = arith.addf %174, %175 : vector<16x16xf32>
    %c0_172 = arith.constant 0 : index
    %c0_173 = arith.constant 0 : index
    %c80 = arith.constant 80 : index
    %177 = vector.load %arg10[%c0_172, %c0_173, %c80] : memref<1x16x128xf32, #tpu.memory_space<vmem>>, vector<1x16x16xf32>
    %178 = vector.shape_cast %177 : vector<1x16x16xf32> to vector<16x16xf32>
    %179 = vector.shape_cast %176 : vector<16x16xf32> to vector<1x16x16xf32>
    tpu.vector_store %arg10[%c0_172, %c0_173, %c80], %179 {strides = array<i32>} : memref<1x16x128xf32, #tpu.memory_space<vmem>>, vector<1x16x16xf32>,
    %c0_174 = arith.constant 0 : index
    %c108 = arith.constant 108 : index
    %180 = vector.load %arg14[%c0_174, %c108] : memref<16x144xf32, #tpu.memory_space<vmem>>, vector<16x16xf32>
    %181 = vector.broadcast %106 : vector<16x1xf32> to vector<16x16xf32>
    %182 = arith.mulf %180, %181 : vector<16x16xf32>
    %183 = vector.broadcast %107 : vector<16x1xf32> to vector<16x16xf32>
    %184 = arith.addf %182, %183 : vector<16x16xf32>
    %cst_175 = arith.constant 0.000000e+00 : f32
    %185 = vector.broadcast %cst_175 : f32 to vector<16x16xf32>
    %186 = arith.maximumf %184, %185 : vector<16x16xf32>
    %c0_176 = arith.constant 0 : index
    %c108_177 = arith.constant 108 : index
    %187 = vector.load %arg15[%c0_176, %c108_177] : memref<16x144xf32, #tpu.memory_space<vmem>>, vector<16x16xf32>
    %188 = arith.addf %186, %187 : vector<16x16xf32>
    %c0_178 = arith.constant 0 : index
    %c0_179 = arith.constant 0 : index
    %c96 = arith.constant 96 : index
    %189 = vector.load %arg10[%c0_178, %c0_179, %c96] : memref<1x16x128xf32, #tpu.memory_space<vmem>>, vector<1x16x16xf32>
    %190 = vector.shape_cast %189 : vector<1x16x16xf32> to vector<16x16xf32>
    %191 = vector.shape_cast %188 : vector<16x16xf32> to vector<1x16x16xf32>
    tpu.vector_store %arg10[%c0_178, %c0_179, %c96], %191 {strides = array<i32>} : memref<1x16x128xf32, #tpu.memory_space<vmem>>, vector<1x16x16xf32>,
    %c0_180 = arith.constant 0 : index
    %c126 = arith.constant 126 : index
    %192 = vector.load %arg14[%c0_180, %c126] : memref<16x144xf32, #tpu.memory_space<vmem>>, vector<16x16xf32>
    %193 = vector.broadcast %106 : vector<16x1xf32> to vector<16x16xf32>
    %194 = arith.mulf %192, %193 : vector<16x16xf32>
    %195 = vector.broadcast %107 : vector<16x1xf32> to vector<16x16xf32>
    %196 = arith.addf %194, %195 : vector<16x16xf32>
    %cst_181 = arith.constant 0.000000e+00 : f32
    %197 = vector.broadcast %cst_181 : f32 to vector<16x16xf32>
    %198 = arith.maximumf %196, %197 : vector<16x16xf32>
    %c0_182 = arith.constant 0 : index
    %c126_183 = arith.constant 126 : index
    %199 = vector.load %arg15[%c0_182, %c126_183] : memref<16x144xf32, #tpu.memory_space<vmem>>, vector<16x16xf32>
    %200 = arith.addf %198, %199 : vector<16x16xf32>
    %c0_184 = arith.constant 0 : index
    %c0_185 = arith.constant 0 : index
    %c112 = arith.constant 112 : index
    %201 = vector.load %arg10[%c0_184, %c0_185, %c112] : memref<1x16x128xf32, #tpu.memory_space<vmem>>, vector<1x16x16xf32>
    %202 = vector.shape_cast %201 : vector<1x16x16xf32> to vector<16x16xf32>
    %203 = vector.shape_cast %200 : vector<16x16xf32> to vector<1x16x16xf32>
    tpu.vector_store %arg10[%c0_184, %c0_185, %c112], %203 {strides = array<i32>} : memref<1x16x128xf32, #tpu.memory_space<vmem>>, vector<1x16x16xf32>,
    return
  }
  func.func @transform_0(%arg0: i32, %arg1: i32) -> (i32, i32, i32, i32) {
    %c0_i32 = arith.constant 0 : i32
    %c0_i32_0 = arith.constant 0 : i32
    %c0_i32_1 = arith.constant 0 : i32
    return %arg0, %arg1, %c0_i32, %c0_i32_0 : i32, i32, i32, i32
  }
  func.func @transform_1(%arg0: i32, %arg1: i32) -> (i32, i32) {
    %c0_i32 = arith.constant 0 : i32
    %c0_i32_0 = arith.constant 0 : i32
    %c0_i32_1 = arith.constant 0 : i32
    return %c0_i32, %c0_i32_0 : i32, i32
  }
  func.func @transform_2(%arg0: i32, %arg1: i32) -> (i32, i32) {
    %c0_i32 = arith.constant 0 : i32
    %c0_i32_0 = arith.constant 0 : i32
    %c0_i32_1 = arith.constant 0 : i32
    return %c0_i32, %c0_i32_0 : i32, i32
  }
  func.func @transform_3(%arg0: i32, %arg1: i32) -> (i32, i32, i32) {
    %c0_i32 = arith.constant 0 : i32
    %c0_i32_0 = arith.constant 0 : i32
    %c0_i32_1 = arith.constant 0 : i32
    %c0_i32_2 = arith.constant 0 : i32
    return %c0_i32, %c0_i32_0, %c0_i32_1 : i32, i32, i32
  }
  func.func @transform_4(%arg0: i32, %arg1: i32) -> (i32, i32) {
    %c0_i32 = arith.constant 0 : i32
    %c0_i32_0 = arith.constant 0 : i32
    %c0_i32_1 = arith.constant 0 : i32
    return %c0_i32, %c0_i32_0 : i32, i32
  }
  func.func @transform_5(%arg0: i32, %arg1: i32) -> (i32, i32) {
    %c0_i32 = arith.constant 0 : i32
    %c0_i32_0 = arith.constant 0 : i32
    %c0_i32_1 = arith.constant 0 : i32
    return %c0_i32, %c0_i32_0 : i32, i32
  }
  func.func @transform_6(%arg0: i32, %arg1: i32) -> (i32, i32) {
    %c0_i32 = arith.constant 0 : i32
    %c0_i32_0 = arith.constant 0 : i32
    %c0_i32_1 = arith.constant 0 : i32
    return %c0_i32, %c0_i32_0 : i32, i32
  }
  func.func @transform_7(%arg0: i32, %arg1: i32) -> (i32, i32) {
    %c0_i32 = arith.constant 0 : i32
    %c0_i32_0 = arith.constant 0 : i32
    %c0_i32_1 = arith.constant 0 : i32
    return %c0_i32, %c0_i32_0 : i32, i32
  }
  func.func @transform_8(%arg0: i32, %arg1: i32) -> (i32, i32, i32) {
    %c0_i32 = arith.constant 0 : i32
    %c0_i32_0 = arith.constant 0 : i32
    return %arg0, %c0_i32, %arg1 : i32, i32, i32
  }
}

</mosaic_0001>

<llo_original>
// kernel: inconv_forward.1
$region0: #{inconv_forward.1}
  #allocation0 [shape = 'u32[]', space=smem, size = 0x4, offset = 0x4, fixed_abs, tag = 'smem constant byte address 0x4 - core index']
  #allocation1 [shape = 'u32[72,128]{1,0:T(1,128)}', space=vmem, size = 0x9000, scoped, tag = 'internal scratch']
  #allocation2 [shape = 'f32[27,256]{1,0:T(8,128)}', space=vmem, size = 0x8000, scoped, tag = 'scratch operand']
  #allocation3 [shape = 'bf16[16,256]{1,0:T(8,128)(2,1)}', space=vmem, size = 0x2000, scoped, tag = 'scratch operand']
  #allocation4 [shape = 'bf16[48,144]{1,0:T(8,128)(2,1)}', space=vmem, size = 0x6000, scoped, tag = 'scratch operand']
  #allocation5 [shape = 'f32[16,144]{1,0:T(8,128)}', space=vmem, size = 0x4000, scoped, tag = 'scratch operand']
  #allocation6 [shape = 'f32[16,144]{1,0:T(8,128)}', space=vmem, size = 0x4000, scoped, tag = 'scratch operand']
  %s0 = inlined_call_operand.vmem [shape: bf16[2,3,3,384], index: 0, kind: input, shape index: {}]
  %s1 = inlined_call_operand.vmem [shape: f32[16,27], index: 1, kind: input, shape index: {}]
  %s2 = inlined_call_operand.vmem [shape: f32[16,2], index: 2, kind: input, shape index: {}]
  %s3 = inlined_call_operand.vmem [shape: bf16[3,16,48], index: 3, kind: input, shape index: {}]
  %s4 = inlined_call_operand.vmem [shape: f32[16,2], index: 4, kind: input, shape index: {}]
  %s5 = inlined_call_operand.vmem [shape: bf16[16,3], index: 5, kind: input, shape index: {}]
  %s6 = inlined_call_operand.vmem [shape: f32[16,2], index: 6, kind: input, shape index: {}]
  %s7 = inlined_call_operand.vmem [shape: f32[1,256], index: 7, kind: input, shape index: {}]
  %s8 = inlined_call_operand.vmem [shape: f32[2,16,384], index: 8, kind: output, shape index: {}]
  %s9 = sld [smem:[#allocation0]]
  $region107: #{inconv_forward.1} parent=0
    _
  %s11 = ssub.s32 1, %s9
  %s12 = scalar_select 0, %s11, %s9
  $region1: #{inconv_forward.1} parent=0
    #allocation7 [shape = 'u8[16384]{0}', space=vmem, size = 0x4000, scoped, tag = 'output window, operand 0']
    loop: start=0, step=1, limit=8
    $region2: #{inconv_forward.1} parent=1 // loop_pre_header
      _
    $region3: #{inconv_forward.1} parent=1 // loop_header
      %s14 = sphi 0, %s18
      %p15 = scmp.ge.s32.totalorder %s14, 8
      %s21 = sphi 0, %s33
      %s22 = sphi 0, %s29
      %s23 = sphi 0, %s21
      %s24 = sphi 0, %s22
      %s25 = sphi 0, %s23
      %s26 = sphi 0, %s24
      %s38 = sphi 0, %s40
      %s41 = sphi 0, %s38
      %s42 = sphi 0, %s41
      %s58 = sphi 0, %s42
      %s62 = sphi 0, %s62
      %s64 = sphi 0, %s62
      %s65 = sphi 0, %s64
      %s79 = sphi 0, %s65
      %s83 = sphi 0, %s83
      %s85 = sphi 0, %s83
      %s86 = sphi 0, %s85
      %s100 = sphi 0, %s86
      %s104 = sphi 0, %s104
      %s106 = sphi 0, %s104
      %s107 = sphi 0, %s106
      %s121 = sphi 0, %s107
      %s125 = sphi 0, %s125
      %s127 = sphi 0, %s125
      %s128 = sphi 0, %s127
      %s142 = sphi 0, %s128
      %s146 = sphi 0, %s146
      %s148 = sphi 0, %s146
      %s149 = sphi 0, %s148
      %s163 = sphi 0, %s149
      %s167 = sphi 0, %s167
      %s169 = sphi 0, %s167
      %s170 = sphi 0, %s169
      %s184 = sphi 0, %s170
      %s188 = sphi 0, %s188
      %s190 = sphi 0, %s188
      %s191 = sphi 0, %s190
      %s205 = sphi 0, %s191
      %s213 = sphi 0, %s215
      %s216 = sphi 0, %s213
      %s217 = sphi 0, %s216
      %s233 = sphi 0, %s217
    $region4: #{inconv_forward.1} parent=1 // loop_header_branch
      %17 = sbr.rel (%p15) target = $region8
    $region5: #{inconv_forward.1} parent=1 // loop_body
      %s19 = ssub.s32 %s14, 1
      %s20 = ssub.s32 %s14, 2
      %s27 = sadd.s32 1, %s22
      %p28 = scmp.ge.s32.totalorder %s27, 3
      %s29 = scalar_select %p28, 0, %s27
      %s30 = sadd.s32 1, %s21
      %s31 = scalar_select %p28, %s30, %s21
      %p32 = scmp.ge.s32.totalorder %s31, 2
      %s33 = scalar_select %p32, 0, %s31
      %s34 = ssub.s32 %s21, %s33
      %s35 = ssub.s32 %s22, %s29
      %s36 = sor.u32 %s34, %s35
      %p37 = scmp.eq.s32.totalorder %s36, 0
      %s39 = sadd.s32 %s38, 1
      %s40 = scalar_select %p37, %s38, %s39
      %p43 = pneg %p37
      %p44 = scmp.eq.s32.totalorder %s14, 5
      %p45 = por %p43, %p44
      %p46 = scmp.ne.s32.totalorder %s38, %s41
      %p47 = scmp.eq.s32.totalorder %s14, 0
      %p48 = por %p46, %p47
      %p49 = scmp.ne.s32.totalorder %s38, %s41
      %p50 = scmp.eq.s32.totalorder %s19, 5
      %p51 = por %p49, %p50
      %p52 = scmp.ne.s32.totalorder %s41, %s42
      %p53 = scmp.eq.s32.totalorder %s19, 0
      %p54 = por %p52, %p53
      %p55 = scmp.ne.s32.totalorder %s41, %s42
      %p56 = scmp.eq.s32.totalorder %s20, 5
      %p57 = por %p55, %p56
      %p59 = scmp.ne.s32.totalorder %s42, %s58
      %p60 = scmp.eq.s32.totalorder %s20, 0
      %p61 = por %p59, %p60
      %s63 = sadd.s32 %s62, 1
      %p66 = scmp.eq.s32.totalorder %s14, 5
      %p67 = scmp.ne.s32.totalorder %s62, %s64
      %p68 = scmp.eq.s32.totalorder %s14, 0
      %p69 = por %p67, %p68
      %p70 = scmp.ne.s32.totalorder %s62, %s64
      %p71 = scmp.eq.s32.totalorder %s19, 5
      %p72 = por %p70, %p71
      %p73 = scmp.ne.s32.totalorder %s64, %s65
      %p74 = scmp.eq.s32.totalorder %s19, 0
      %p75 = por %p73, %p74
      %p76 = scmp.ne.s32.totalorder %s64, %s65
      %p77 = scmp.eq.s32.totalorder %s20, 5
      %p78 = por %p76, %p77
      %p80 = scmp.ne.s32.totalorder %s65, %s79
      %p81 = scmp.eq.s32.totalorder %s20, 0
      %p82 = por %p80, %p81
      %s84 = sadd.s32 %s83, 1
      %p87 = scmp.eq.s32.totalorder %s14, 5
      %p88 = scmp.ne.s32.totalorder %s83, %s85
      %p89 = scmp.eq.s32.totalorder %s14, 0
      %p90 = por %p88, %p89
      %p91 = scmp.ne.s32.totalorder %s83, %s85
      %p92 = scmp.eq.s32.totalorder %s19, 5
      %p93 = por %p91, %p92
      %p94 = scmp.ne.s32.totalorder %s85, %s86
      %p95 = scmp.eq.s32.totalorder %s19, 0
      %p96 = por %p94, %p95
      %p97 = scmp.ne.s32.totalorder %s85, %s86
      %p98 = scmp.eq.s32.totalorder %s20, 5
      %p99 = por %p97, %p98
      %p101 = scmp.ne.s32.totalorder %s86, %s100
      %p102 = scmp.eq.s32.totalorder %s20, 0
      %p103 = por %p101, %p102
      %s105 = sadd.s32 %s104, 1
      %p108 = scmp.eq.s32.totalorder %s14, 5
      %p109 = scmp.ne.s32.totalorder %s104, %s106
      %p110 = scmp.eq.s32.totalorder %s14, 0
      %p111 = por %p109, %p110
      %p112 = scmp.ne.s32.totalorder %s104, %s106
      %p113 = scmp.eq.s32.totalorder %s19, 5
      %p114 = por %p112, %p113
      %p115 = scmp.ne.s32.totalorder %s106, %s107
      %p116 = scmp.eq.s32.totalorder %s19, 0
      %p117 = por %p115, %p116
      %p118 = scmp.ne.s32.totalorder %s106, %s107
      %p119 = scmp.eq.s32.totalorder %s20, 5
      %p120 = por %p118, %p119
      %p122 = scmp.ne.s32.totalorder %s107, %s121
      %p123 = scmp.eq.s32.totalorder %s20, 0
      %p124 = por %p122, %p123
      %s126 = sadd.s32 %s125, 1
      %p129 = scmp.eq.s32.totalorder %s14, 5
      %p130 = scmp.ne.s32.totalorder %s125, %s127
      %p131 = scmp.eq.s32.totalorder %s14, 0
      %p132 = por %p130, %p131
      %p133 = scmp.ne.s32.totalorder %s125, %s127
      %p134 = scmp.eq.s32.totalorder %s19, 5
      %p135 = por %p133, %p134
      %p136 = scmp.ne.s32.totalorder %s127, %s128
      %p137 = scmp.eq.s32.totalorder %s19, 0
      %p138 = por %p136, %p137
      %p139 = scmp.ne.s32.totalorder %s127, %s128
      %p140 = scmp.eq.s32.totalorder %s20, 5
      %p141 = por %p139, %p140
      %p143 = scmp.ne.s32.totalorder %s128, %s142
      %p144 = scmp.eq.s32.totalorder %s20, 0
      %p145 = por %p143, %p144
      %s147 = sadd.s32 %s146, 1
      %p150 = scmp.eq.s32.totalorder %s14, 5
      %p151 = scmp.ne.s32.totalorder %s146, %s148
      %p152 = scmp.eq.s32.totalorder %s14, 0
      %p153 = por %p151, %p152
      %p154 = scmp.ne.s32.totalorder %s146, %s148
      %p155 = scmp.eq.s32.totalorder %s19, 5
      %p156 = por %p154, %p155
      %p157 = scmp.ne.s32.totalorder %s148, %s149
      %p158 = scmp.eq.s32.totalorder %s19, 0
      %p159 = por %p157, %p158
      %p160 = scmp.ne.s32.totalorder %s148, %s149
      %p161 = scmp.eq.s32.totalorder %s20, 5
      %p162 = por %p160, %p161
      %p164 = scmp.ne.s32.totalorder %s149, %s163
      %p165 = scmp.eq.s32.totalorder %s20, 0
      %p166 = por %p164, %p165
      %s168 = sadd.s32 %s167, 1
      %p171 = scmp.eq.s32.totalorder %s14, 5
      %p172 = scmp.ne.s32.totalorder %s167, %s169
      %p173 = scmp.eq.s32.totalorder %s14, 0
      %p174 = por %p172, %p173
      %p175 = scmp.ne.s32.totalorder %s167, %s169
      %p176 = scmp.eq.s32.totalorder %s19, 5
      %p177 = por %p175, %p176
      %p178 = scmp.ne.s32.totalorder %s169, %s170
      %p179 = scmp.eq.s32.totalorder %s19, 0
      %p180 = por %p178, %p179
      %p181 = scmp.ne.s32.totalorder %s169, %s170
      %p182 = scmp.eq.s32.totalorder %s20, 5
      %p183 = por %p181, %p182
      %p185 = scmp.ne.s32.totalorder %s170, %s184
      %p186 = scmp.eq.s32.totalorder %s20, 0
      %p187 = por %p185, %p186
      %s189 = sadd.s32 %s188, 1
      %p192 = scmp.eq.s32.totalorder %s14, 5
      %p193 = scmp.ne.s32.totalorder %s188, %s190
      %p194 = scmp.eq.s32.totalorder %s14, 0
      %p195 = por %p193, %p194
      %p196 = scmp.ne.s32.totalorder %s188, %s190
      %p197 = scmp.eq.s32.totalorder %s19, 5
      %p198 = por %p196, %p197
      %p199 = scmp.ne.s32.totalorder %s190, %s191
      %p200 = scmp.eq.s32.totalorder %s19, 0
      %p201 = por %p199, %p200
      %p202 = scmp.ne.s32.totalorder %s190, %s191
      %p203 = scmp.eq.s32.totalorder %s20, 5
      %p204 = por %p202, %p203
      %p206 = scmp.ne.s32.totalorder %s191, %s205
      %p207 = scmp.eq.s32.totalorder %s20, 0
      %p208 = por %p206, %p207
      %s209 = ssub.s32 %s21, %s33
      %s210 = ssub.s32 %s22, %s29
      %s211 = sor.u32 %s209, %s210
      %p212 = scmp.eq.s32.totalorder %s211, 0
      %s214 = sadd.s32 %s213, 1
      %s215 = scalar_select %p212, %s213, %s214
      %p218 = pneg %p212
      %p219 = scmp.eq.s32.totalorder %s14, 5
      %p220 = por %p218, %p219
      %p221 = scmp.ne.s32.totalorder %s213, %s216
      %p222 = scmp.eq.s32.totalorder %s14, 0
      %p223 = por %p221, %p222
      %p224 = scmp.ne.s32.totalorder %s213, %s216
      %p225 = scmp.eq.s32.totalorder %s19, 5
      %p226 = por %p224, %p225
      %p227 = scmp.ne.s32.totalorder %s216, %s217
      %p228 = scmp.eq.s32.totalorder %s19, 0
      %p229 = por %p227, %p228
      %p230 = scmp.ne.s32.totalorder %s216, %s217
      %p231 = scmp.eq.s32.totalorder %s20, 5
      %p232 = por %p230, %p231
      %p234 = scmp.ne.s32.totalorder %s217, %s233
      %p235 = scmp.eq.s32.totalorder %s20, 0
      %p236 = por %p234, %p235
      %p237 = scmp.le.s32.totalorder 1, %s14
      %p238 = scmp.lt.s32.totalorder %s14, 7
      %p239 = pnand %p237, %p238
      %p240 = pneg %p239
      // Predicated region
      $region9: #{inconv_forward.1} parent=5 // pred_check
        _
      $region10: #{inconv_forward.1} parent=5 // pred_check_branch
        %242 = sbr.rel (%p239) target = $region12
      $region11: #{inconv_forward.1} parent=5 // pred_region
        %s243 = ssub.s32 %s14, 1
        // Predicated region
        $region13: #{inconv_forward.1} parent=11 // pred_check
          %p244 = pneg %p75
        $region14: #{inconv_forward.1} parent=11 // pred_check_branch
          %246 = sbr.rel (%p244) target = $region16
        $region15: #{inconv_forward.1} parent=11 // pred_region
          _
        $region16: #{inconv_forward.1} parent=11 // pred_fallthru
          _
        // Predicated region
        $region17: #{inconv_forward.1} parent=11 // pred_check
          %p247 = pneg %p96
        $region18: #{inconv_forward.1} parent=11 // pred_check_branch
          %249 = sbr.rel (%p247) target = $region20
        $region19: #{inconv_forward.1} parent=11 // pred_region
          _
        $region20: #{inconv_forward.1} parent=11 // pred_fallthru
          _
        // Predicated region
        $region21: #{inconv_forward.1} parent=11 // pred_check
          %p250 = pneg %p117
        $region22: #{inconv_forward.1} parent=11 // pred_check_branch
          %252 = sbr.rel (%p250) target = $region24
        $region23: #{inconv_forward.1} parent=11 // pred_region
          _
        $region24: #{inconv_forward.1} parent=11 // pred_fallthru
          _
        // Predicated region
        $region25: #{inconv_forward.1} parent=11 // pred_check
          %p253 = pneg %p138
        $region26: #{inconv_forward.1} parent=11 // pred_check_branch
          %255 = sbr.rel (%p253) target = $region28
        $region27: #{inconv_forward.1} parent=11 // pred_region
          _
        $region28: #{inconv_forward.1} parent=11 // pred_fallthru
          _
        // Predicated region
        $region29: #{inconv_forward.1} parent=11 // pred_check
          %p256 = pneg %p159
        $region30: #{inconv_forward.1} parent=11 // pred_check_branch
          %258 = sbr.rel (%p256) target = $region32
        $region31: #{inconv_forward.1} parent=11 // pred_region
          _
        $region32: #{inconv_forward.1} parent=11 // pred_fallthru
          _
        // Predicated region
        $region33: #{inconv_forward.1} parent=11 // pred_check
          %p259 = pneg %p180
        $region34: #{inconv_forward.1} parent=11 // pred_check_branch
          %261 = sbr.rel (%p259) target = $region36
        $region35: #{inconv_forward.1} parent=11 // pred_region
          _
        $region36: #{inconv_forward.1} parent=11 // pred_fallthru
          _
        // Predicated region
        $region37: #{inconv_forward.1} parent=11 // pred_check
          %p262 = pneg %p201
        $region38: #{inconv_forward.1} parent=11 // pred_check_branch
          %264 = sbr.rel (%p262) target = $region40
        $region39: #{inconv_forward.1} parent=11 // pred_region
          _
        $region40: #{inconv_forward.1} parent=11 // pred_fallthru
          _
      $region12: #{inconv_forward.1} parent=5 // pred_fallthru
        _
      %p265 = scmp.lt.s32.totalorder %s14, 6
      // Predicated region
      $region41: #{inconv_forward.1} parent=5 // pred_check
        %p266 = pneg %p265
      $region42: #{inconv_forward.1} parent=5 // pred_check_branch
        %268 = sbr.rel (%p266) target = $region44
      $region43: #{inconv_forward.1} parent=5 // pred_region
        // Predicated region
        $region45: #{inconv_forward.1} parent=43 // pred_check
          %p269 = pneg %p48
        $region46: #{inconv_forward.1} parent=43 // pred_check_branch
          %271 = sbr.rel (%p269) target = $region48
        $region47: #{inconv_forward.1} parent=43 // pred_region
          %p272 = scmp.lt.s32.totalorder %s21, 1
          %s273 = scalar_select %p272, %s21, 1
          %p274 = scmp.lt.s32.totalorder %s22, 2
          %s275 = scalar_select %p274, %s22, 2
          %s276 = smul.addr %s275, 3
          %s277 = smul.addr %s273, 9
          %s278 = sadd.s32 %s276, %s277
          %s279 = smul.addr %s278, 2
          %s280 = scalar_lea.vmem %s0, %s279
        $region48: #{inconv_forward.1} parent=43 // pred_fallthru
          _
      $region44: #{inconv_forward.1} parent=5 // pred_fallthru
        _
      %p281 = scmp.le.s32.totalorder 1, %s14
      %p282 = scmp.lt.s32.totalorder %s14, 7
      %p283 = pnand %p281, %p282
      %p284 = pneg %p283
      // Predicated region
      $region49: #{inconv_forward.1} parent=5 // pred_check
        _
      $region50: #{inconv_forward.1} parent=5 // pred_check_branch
        %286 = sbr.rel (%p283) target = $region52
      $region51: #{inconv_forward.1} parent=5 // pred_region
        %s287 = ssub.s32 %s14, 1
        %p288 = scmp.lt.s32.totalorder %s23, 1
        %s289 = scalar_select %p288, %s23, 1
        %p290 = scmp.lt.s32.totalorder %s24, 2
        %s291 = scalar_select %p290, %s24, 2
        %s292 = smul.addr %s291, 3
        %s293 = smul.addr %s289, 9
        %s294 = sadd.s32 %s292, %s293
        %s295 = smul.addr %s294, 2
        %s296 = scalar_lea.vmem %s0, %s295
        %p297 = pneg %p54
        %p298 = pneg %p51
        %p299 = pneg %p75
        %p300 = pneg %p72
        %p301 = pneg %p96
        %p302 = pneg %p93
        %p303 = pneg %p117
        %p304 = pneg %p114
        %p305 = pneg %p138
        %p306 = pneg %p135
        %p307 = pneg %p159
        %p308 = pneg %p156
        %p309 = pneg %p180
        %p310 = pneg %p177
        %p311 = pneg %p201
        %p312 = pneg %p198
        %p313 = pneg %p229
        %p314 = pneg %p226
        %s315 = sand.u32 %s216, 1
        %s316 = sand.u32 %s216, 1
        %s317 = smul.addr %s316, 16
        %s318 = scalar_lea.vmem [#allocation7], %s317
        %p319 = scmp.lt.s32.totalorder %s23, 1
        %s320 = scalar_select %p319, %s23, 1
        %p321 = scmp.lt.s32.totalorder %s24, 2
        %s322 = scalar_select %p321, %s24, 2
        %s323 = smul.addr %s322, 3
        %s324 = smul.addr %s320, 9
        %s325 = sadd.s32 %s323, %s324
        %s326 = smul.addr %s325, 2
        %s327 = scalar_lea.vmem %s0, %s326
        %v329 = vld [vmem:[%s327] sm:$0xf]
        %v330 = vunpack.c.l.bf16 %v329
        %332 = vst [vmem:[#allocation1] ss:$2 sm:$0xff] %v330
        %v333 = vld.sshfl [vmem:[#allocation1] sm:$0xff pattern:$0x75316420]
        %v334 = vld.sshfl [vmem:[#allocation1 + $0x8] sm:$0xff pattern:$0x75316420]
        %337 = vst [vmem:[#allocation2] sm:$0x7] %v333
        %338 = vst [vmem:[#allocation2 + $0x8] sm:$0x7] %v334
        %v339 = vld [vmem:[%s327] sm:$0x3f]
        %v340 = vunpack.c.l.bf16 %v339
        %v341 = vunpack.c.h.bf16 %v339
        %344 = vst [vmem:[#allocation1] ss:$2 sm:$0xff] %v340
        %s345 = scalar_lea.vmem [#allocation1], 16
        %346 = vst [vmem:[%s345] ss:$2 sm:$0xff] %v341
        %v347 = vld.sshfl [vmem:[#allocation1] sm:$0xff pattern:$0x75316420]
        %v348 = vld.sshfl [vmem:[#allocation1 + $0x8] sm:$0xff pattern:$0x75316420]
        %v349 = vld.sshfl [vmem:[#allocation1 + $0x10] sm:$0xff pattern:$0x75316420]
        %v350 = vrot.slane %v347, 5
        %v351 = vrot.slane %v348, 5
        %v352 = vrot.slane %v349, 5
        %353 = vrot.lane.b32.xlu0 %v350, 127
        %v354 = vpop.permute.xlu0 %353
        %355 = vrot.lane.b32.xlu0 %v351, 127
        %v356 = vpop.permute.xlu0 %355
        %357 = vrot.lane.b32.xlu0 %v352, 127
        %v358 = vpop.permute.xlu0 %357
        %vm359 = vcmask 1039360
        %v360 = vsel %vm359, %v354, %v356
        %v361 = vsel %vm359, %v356, %v358
        %364 = vst [vmem:[#allocation2] sm:$0x38] %v360
        %365 = vst [vmem:[#allocation2 + $0x8] sm:$0x38] %v361
        %v366 = vld [vmem:[%s327] sm:$0x3f]
        %v367 = vunpack.c.l.bf16 %v366
        %v368 = vunpack.c.h.bf16 %v366
        %371 = vst [vmem:[#allocation1] ss:$2 sm:$0xff] %v367
        %s372 = scalar_lea.vmem [#allocation1], 16
        %373 = vst [vmem:[%s372] ss:$2 sm:$0xff] %v368
        %v374 = vld.sshfl [vmem:[#allocation1] sm:$0xff pattern:$0x75316420]
        %v375 = vld.sshfl [vmem:[#allocation1 + $0x8] sm:$0xff pattern:$0x75316420]
        %v376 = vld.sshfl [vmem:[#allocation1 + $0x10] sm:$0xff pattern:$0x75316420]
        %v377 = vrot.slane %v374, 2
        %v378 = vrot.slane %v375, 2
        %v379 = vrot.slane %v376, 2
        %380 = vrot.lane.b32.xlu0 %v377, 126
        %v381 = vpop.permute.xlu0 %380
        %382 = vrot.lane.b32.xlu0 %v378, 126
        %v383 = vpop.permute.xlu0 %382
        %384 = vrot.lane.b32.xlu0 %v379, 126
        %v385 = vpop.permute.xlu0 %384
        %vm386 = vcmask 1031168
        %v387 = vsel %vm386, %v381, %v383
        %v388 = vsel %vm386, %v383, %v385
        %391 = vst [vmem:[#allocation2] sm:$0xc0] %v387
        %392 = vst [vmem:[#allocation2 + $0x8] sm:$0xc0] %v388
        %393 = vst [vmem:[#allocation2 + $0x10] sm:$0x1] %v387
        %394 = vst [vmem:[#allocation2 + $0x18] sm:$0x1] %v388
        %v395 = vld [vmem:[%s327] sm:$0x3f]
        %v396 = vunpack.c.l.bf16 %v395
        %v397 = vunpack.c.h.bf16 %v395
        %400 = vst [vmem:[#allocation1] ss:$2 sm:$0xff] %v396
        %s401 = scalar_lea.vmem [#allocation1], 16
        %402 = vst [vmem:[%s401] ss:$2 sm:$0xff] %v397
        %v403 = vld.sshfl [vmem:[#allocation1] sm:$0xff pattern:$0x75316420]
        %v404 = vld.sshfl [vmem:[#allocation1 + $0x8] sm:$0xff pattern:$0x75316420]
        %v405 = vld.sshfl [vmem:[#allocation1 + $0x10] sm:$0xff pattern:$0x75316420]
        %v406 = vrot.slane %v403, 7
        %v407 = vrot.slane %v404, 7
        %v408 = vrot.slane %v405, 7
        %409 = vrot.lane.b32.xlu0 %v406, 110
        %v410 = vpop.permute.xlu0 %409
        %411 = vrot.lane.b32.xlu0 %v407, 110
        %v412 = vpop.permute.xlu0 %411
        %413 = vrot.lane.b32.xlu0 %v408, 110
        %v414 = vpop.permute.xlu0 %413
        %vm415 = vcmask 900096
        %v416 = vsel %vm415, %v410, %v412
        %v417 = vsel %vm415, %v412, %v414
        %420 = vst [vmem:[#allocation2 + $0x10] sm:$0xe] %v416
        %421 = vst [vmem:[#allocation2 + $0x18] sm:$0xe] %v417
        %v422 = vld [vmem:[%s327] sm:$0x3f]
        %v423 = vunpack.c.l.bf16 %v422
        %v424 = vunpack.c.h.bf16 %v422
        %s427 = scalar_lea.vmem [#allocation1], 1
        %428 = vst [vmem:[%s427] ss:$2 sm:$0xff] %v423
        %s429 = scalar_lea.vmem [#allocation1], 17
        %430 = vst [vmem:[%s429] ss:$2 sm:$0xff] %v424
        %v431 = vld.sshfl [vmem:[#allocation1] sm:$0xff pattern:$0x75316420]
        %v432 = vld.sshfl [vmem:[#allocation1 + $0x8] sm:$0xff pattern:$0x75316420]
        %v433 = vld.sshfl [vmem:[#allocation1 + $0x10] sm:$0xff pattern:$0x75316420]
        %434 = vrot.lane.b32.xlu0 %v431, 109
        %v435 = vpop.permute.xlu0 %434
        %436 = vrot.lane.b32.xlu0 %v432, 109
        %v437 = vpop.permute.xlu0 %436
        %438 = vrot.lane.b32.xlu0 %v433, 109
        %v439 = vpop.permute.xlu0 %438
        %vm440 = vcmask 891904
        %v441 = vsel %vm440, %v435, %v437
        %v442 = vsel %vm440, %v437, %v439
        %445 = vst [vmem:[#allocation2 + $0x10] sm:$0x70] %v441
        %446 = vst [vmem:[#allocation2 + $0x18] sm:$0x70] %v442
        %v447 = vld [vmem:[%s327] sm:$0x3f]
        %v448 = vunpack.c.l.bf16 %v447
        %v449 = vunpack.c.h.bf16 %v447
        %452 = vst [vmem:[#allocation1] ss:$2 sm:$0xff] %v448
        %s453 = scalar_lea.vmem [#allocation1], 16
        %454 = vst [vmem:[%s453] ss:$2 sm:$0xff] %v449
        %v455 = vld.sshfl [vmem:[#allocation1] sm:$0xff pattern:$0x75316420]
        %v456 = vld.sshfl [vmem:[#allocation1 + $0x8] sm:$0xff pattern:$0x75316420]
        %v457 = vld.sshfl [vmem:[#allocation1 + $0x10] sm:$0xff pattern:$0x75316420]
        %v458 = vrot.slane %v455, 1
        %v459 = vrot.slane %v456, 1
        %v460 = vrot.slane %v457, 1
        %461 = vrot.lane.b32.xlu0 %v458, 108
        %v462 = vpop.permute.xlu0 %461
        %463 = vrot.lane.b32.xlu0 %v459, 108
        %v464 = vpop.permute.xlu0 %463
        %465 = vrot.lane.b32.xlu0 %v460, 108
        %v466 = vpop.permute.xlu0 %465
        %vm467 = vcmask 883712
        %v468 = vsel %vm467, %v462, %v464
        %v469 = vsel %vm467, %v464, %v466
        %472 = vst [vmem:[#allocation2 + $0x10] sm:$0x80] %v468
        %473 = vst [vmem:[#allocation2 + $0x18] sm:$0x80] %v469
        %474 = vst [vmem:[#allocation2 + $0x20] sm:$0x3] %v468
        %475 = vst [vmem:[#allocation2 + $0x28] sm:$0x3] %v469
        %v476 = vld [vmem:[%s327] sm:$0x3f]
        %v477 = vunpack.c.l.bf16 %v476
        %v478 = vunpack.c.h.bf16 %v476
        %481 = vst [vmem:[#allocation1] ss:$2 sm:$0xff] %v477
        %s482 = scalar_lea.vmem [#allocation1], 16
        %483 = vst [vmem:[%s482] ss:$2 sm:$0xff] %v478
        %v484 = vld.sshfl [vmem:[#allocation1] sm:$0xff pattern:$0x75316420]
        %v485 = vld.sshfl [vmem:[#allocation1 + $0x8] sm:$0xff pattern:$0x75316420]
        %v486 = vld.sshfl [vmem:[#allocation1 + $0x10] sm:$0xff pattern:$0x75316420]
        %v487 = vrot.slane %v484, 6
        %v488 = vrot.slane %v485, 6
        %v489 = vrot.slane %v486, 6
        %490 = vrot.lane.b32.xlu0 %v487, 92
        %v491 = vpop.permute.xlu0 %490
        %492 = vrot.lane.b32.xlu0 %v488, 92
        %v493 = vpop.permute.xlu0 %492
        %494 = vrot.lane.b32.xlu0 %v489, 92
        %v495 = vpop.permute.xlu0 %494
        %vm496 = vcmask 752640
        %v497 = vsel %vm496, %v491, %v493
        %v498 = vsel %vm496, %v493, %v495
        %501 = vst [vmem:[#allocation2 + $0x20] sm:$0x1c] %v497
        %502 = vst [vmem:[#allocation2 + $0x28] sm:$0x1c] %v498
        %v503 = vld [vmem:[%s327] sm:$0x3f]
        %v504 = vunpack.c.l.bf16 %v503
        %v505 = vunpack.c.h.bf16 %v503
        %508 = vst [vmem:[#allocation1] ss:$2 sm:$0xff] %v504
        %s509 = scalar_lea.vmem [#allocation1], 16
        %510 = vst [vmem:[%s509] ss:$2 sm:$0xff] %v505
        %v511 = vld.sshfl [vmem:[#allocation1] sm:$0xff pattern:$0x75316420]
        %v512 = vld.sshfl [vmem:[#allocation1 + $0x8] sm:$0xff pattern:$0x75316420]
        %v513 = vld.sshfl [vmem:[#allocation1 + $0x10] sm:$0xff pattern:$0x75316420]
        %v514 = vrot.slane %v511, 3
        %v515 = vrot.slane %v512, 3
        %v516 = vrot.slane %v513, 3
        %517 = vrot.lane.b32.xlu0 %v514, 91
        %v518 = vpop.permute.xlu0 %517
        %519 = vrot.lane.b32.xlu0 %v515, 91
        %v520 = vpop.permute.xlu0 %519
        %521 = vrot.lane.b32.xlu0 %v516, 91
        %v522 = vpop.permute.xlu0 %521
        %vm523 = vcmask 744448
        %v524 = vsel %vm523, %v518, %v520
        %v525 = vsel %vm523, %v520, %v522
        %528 = vst [vmem:[#allocation2 + $0x20] sm:$0xe0] %v524
        %529 = vst [vmem:[#allocation2 + $0x28] sm:$0xe0] %v525
        %v530 = vld [vmem:[%s327] sm:$0x3f]
        %v531 = vunpack.c.l.bf16 %v530
        %v532 = vunpack.c.h.bf16 %v530
        %535 = vst [vmem:[#allocation1] ss:$2 sm:$0xff] %v531
        %s536 = scalar_lea.vmem [#allocation1], 16
        %537 = vst [vmem:[%s536] ss:$2 sm:$0xff] %v532
        %v538 = vld.sshfl [vmem:[#allocation1] sm:$0xff pattern:$0x75316420]
        %v539 = vld.sshfl [vmem:[#allocation1 + $0x8] sm:$0xff pattern:$0x75316420]
        %v540 = vld.sshfl [vmem:[#allocation1 + $0x10] sm:$0xff pattern:$0x75316420]
        %541 = vrot.lane.b32.xlu0 %v538, 90
        %v542 = vpop.permute.xlu0 %541
        %543 = vrot.lane.b32.xlu0 %v539, 90
        %v544 = vpop.permute.xlu0 %543
        %545 = vrot.lane.b32.xlu0 %v540, 90
        %v546 = vpop.permute.xlu0 %545
        %vm547 = vcmask 736256
        %v548 = vsel %vm547, %v542, %v544
        %v549 = vsel %vm547, %v544, %v546
        %552 = vst [vmem:[#allocation2 + $0x30] sm:$0x7] %v548
        %553 = vst [vmem:[#allocation2 + $0x38] sm:$0x7] %v549
        %v554 = vld [vmem:[%s1] sm:$0xff]
        %v555 = vld [vmem:[%s1 + $0x8] sm:$0xff]
        %v556 = vld [vmem:[#allocation2] sm:$0xff]
        %v557 = vld [vmem:[#allocation2 + $0x8] sm:$0xff]
        %v558 = vld [vmem:[#allocation2 + $0x10] sm:$0xff]
        %v559 = vld [vmem:[#allocation2 + $0x18] sm:$0xff]
        %v560 = vld [vmem:[#allocation2 + $0x20] sm:$0xff]
        %v561 = vld [vmem:[#allocation2 + $0x28] sm:$0xff]
        %v562 = vld [vmem:[#allocation2 + $0x30] sm:$0x7]
        %v563 = vld [vmem:[#allocation2 + $0x38] sm:$0x7]
        %vm564 = vcmask 220160
        %v566 = vsel %vm564, %v554, 0
        %v569 = vsel %vm564, %v555, 0
        %vm571 = vcmask 1042432
        %v573 = vsel %vm571, %v562, 0
        %v576 = vsel %vm571, %v563, 0
        %578 = vmatpush.msra.mxu0 0.0
        %579 = vmatpush.msra.mxu0 0.0
        %580 = vmatpush.msra.mxu0 0.0
        %581 = vmatpush.msra.mxu0 0.0
        %582 = vmatpush.msra.mxu0 0.0
        %583 = vmatpush.msra.mxu0 0.0
        %584 = vmatpush.msra.mxu0 0.0
        %585 = vmatpush.msra.mxu0 0.0
        %586 = vmatpush.msra.mxu0 0.0
        %587 = vmatpush.msra.mxu0 0.0
        %588 = vmatpush.msra.mxu0 0.0
        %589 = vmatpush.msra.mxu0 0.0
        %590 = vmatpush.msra.mxu0 %v573
        %591 = vmatpush.msra.mxu0 %v560
        %592 = vmatpush.msra.mxu0 %v558
        %593 = vmatpush.msra.mxu0 %v556
        %594 = vmatmul.f32.gmra.mxu0 %v566
        %v595 = vpop.f32.mrf.mxu0
        %v596 = vadd.f32 0.0, %v595
        %597 = vmatmul.f32.gmra.mxu0 %v569
        %v598 = vpop.f32.mrf.mxu0
        %v599 = vadd.f32 0.0, %v598
        %600 = vdwg.mxu0
        %601 = vmatpush.msra.mxu0 0.0
        %602 = vmatpush.msra.mxu0 0.0
        %603 = vmatpush.msra.mxu0 0.0
        %604 = vmatpush.msra.mxu0 0.0
        %605 = vmatpush.msra.mxu0 0.0
        %606 = vmatpush.msra.mxu0 0.0
        %607 = vmatpush.msra.mxu0 0.0
        %608 = vmatpush.msra.mxu0 0.0
        %609 = vmatpush.msra.mxu0 0.0
        %610 = vmatpush.msra.mxu0 0.0
        %611 = vmatpush.msra.mxu0 0.0
        %612 = vmatpush.msra.mxu0 0.0
        %613 = vmatpush.msra.mxu0 %v576
        %614 = vmatpush.msra.mxu0 %v561
        %615 = vmatpush.msra.mxu0 %v559
        %616 = vmatpush.msra.mxu0 %v557
        %617 = vmatmul.f32.gmra.mxu0 %v566
        %v618 = vpop.f32.mrf.mxu0
        %v619 = vadd.f32 0.0, %v618
        %620 = vmatmul.f32.gmra.mxu0 %v569
        %v621 = vpop.f32.mrf.mxu0
        %v622 = vadd.f32 0.0, %v621
        %623 = vdwg.mxu0
        %v624 = vld [vmem:[%s2] sm:$0xff]
        %v625 = vld [vmem:[%s2 + $0x8] sm:$0xff]
        %627 = vset.pattern.permute.xlu0 0
        %628 = vperm.xlu0 %627, %v624
        %v629 = vpop.permute.xlu0 %628
        %632 = vset.pattern.permute.xlu0 0
        %633 = vperm.xlu0 %632, %v625
        %v634 = vpop.permute.xlu0 %633
        %v636 = vmul.f32 %v596, %v629
        %v637 = vmul.f32 %v619, %v629
        %v638 = vmul.f32 %v599, %v634
        %v639 = vmul.f32 %v622, %v634
        %640 = vset.pattern.permute.xlu0 1
        %641 = vperm.xlu0 %640, %v624
        %v642 = vpop.permute.xlu0 %641
        %644 = vset.pattern.permute.xlu0 1
        %645 = vperm.xlu0 %644, %v625
        %v646 = vpop.permute.xlu0 %645
        %v648 = vadd.f32 %v636, %v642
        %v649 = vadd.f32 %v637, %v642
        %v650 = vadd.f32 %v638, %v646
        %v651 = vadd.f32 %v639, %v646
        %v652 = vmax.f32 %v648, 0.0
        %v653 = vmax.f32 %v649, 0.0
        %v654 = vmax.f32 %v650, 0.0
        %v655 = vmax.f32 %v651, 0.0
        %v656 = vld [vmem:[%s7] sm:$0x3]
        %v658 = vperm.slane %v656, 0
        %v659 = vperm.slane %v656, 1
        %v662 = vmul.f32 %v652, %v658
        %v663 = vmul.f32 %v653, %v659
        %v664 = vmul.f32 %v654, %v658
        %v665 = vmul.f32 %v655, %v659
        %v666 = vpack.c.bf16 %v663, %v662
        %v667 = vpack.c.bf16 %v665, %v664
        %668 = vst [vmem:[#allocation3] sm:$0xff] %v666
        %669 = vst [vmem:[#allocation3 + $0x8] sm:$0xff] %v667
        %p670 = scmp.eq.s32.totalorder %s24, 0
        // Predicated region
        $region53: #{inconv_forward.1} parent=51 // pred_check
          %p671 = pneg %p670
        $region54: #{inconv_forward.1} parent=51 // pred_check_branch
          %673 = sbr.rel (%p671) target = $region56
        $region55: #{inconv_forward.1} parent=51 // pred_region
          %vm674 = vcmask 142336
          %675 = vst.msk [vmem:[#allocation3] sm:$0xf] %vm674, 0
          %676 = vst.msk [vmem:[#allocation3 + $0x8] sm:$0xf] %vm674, 0
        $region56: #{inconv_forward.1} parent=51 // pred_fallthru
          _
        %p677 = scmp.eq.s32.totalorder %s24, 2
        // Predicated region
        $region57: #{inconv_forward.1} parent=51 // pred_check
          %p678 = pneg %p677
        $region58: #{inconv_forward.1} parent=51 // pred_check_branch
          %680 = sbr.rel (%p678) target = $region60
        $region59: #{inconv_forward.1} parent=51 // pred_region
          %vm681 = vcmask 421136
          %682 = vst.msk [vmem:[#allocation3 + $0x4] sm:$0xf] %vm681, 0
          %683 = vst.msk [vmem:[#allocation3 + $0xc] sm:$0xf] %vm681, 0
        $region60: #{inconv_forward.1} parent=51 // pred_fallthru
          _
        %v684 = vld [vmem:[#allocation3] sm:$0xff]
        %v685 = vld [vmem:[#allocation3 + $0x8] sm:$0xff]
        %vm686 = vcmask 1043456
        %vm687 = vcmask 130052
        %vm688 = vmor %vm687, %vm686
        %689 = vst.msk [vmem:[#allocation4] sm:$0xff] %vm688, %v684
        %690 = vst.msk [vmem:[#allocation4 + $0x8] sm:$0xff] %vm688, %v685
        %v691 = vld [vmem:[#allocation3] sm:$0xff]
        %v692 = vld [vmem:[#allocation3 + $0x8] sm:$0xff]
        %695 = vrot.lane.b32.xlu0 %v691, 127
        %v696 = vpop.permute.xlu0 %695
        %697 = vrot.lane.b32.xlu0 %v692, 127
        %v698 = vpop.permute.xlu0 %697
        %v699 = vrot.slane %v696, 4
        %v700 = vrot.slane %v698, 4
        %vm701 = vcmask 1039360
        %v702 = vsel %vm701, %v696, %v699
        %v703 = vsel %vm701, %v698, %v700
        %706 = vst.msk [vmem:[#allocation4 + $0x10] sm:$0xff] %vm688, %v702
        %707 = vst.msk [vmem:[#allocation4 + $0x18] sm:$0xff] %vm688, %v703
        %v708 = vld [vmem:[#allocation3] sm:$0xff]
        %v709 = vld [vmem:[#allocation3 + $0x8] sm:$0xff]
        %712 = vrot.lane.b32.xlu0 %v708, 126
        %v713 = vpop.permute.xlu0 %712
        %714 = vrot.lane.b32.xlu0 %v709, 126
        %v715 = vpop.permute.xlu0 %714
        %v716 = vrot.slane %v713, 4
        %v717 = vrot.slane %v715, 4
        %vm718 = vcmask 1031168
        %v719 = vsel %vm718, %v713, %v716
        %v720 = vsel %vm718, %v715, %v717
        %723 = vst.msk [vmem:[#allocation4 + $0x20] sm:$0xff] %vm688, %v719
        %724 = vst.msk [vmem:[#allocation4 + $0x28] sm:$0xff] %vm688, %v720
        %v725 = vld [vmem:[%s3] sm:$0xf]
        %v726 = vld [vmem:[%s3 + $0x4] sm:$0xf]
        %v727 = vld [vmem:[#allocation4] sm:$0xff]
        %v728 = vld [vmem:[#allocation4 + $0x8] sm:$0xff]
        %v729 = vld [vmem:[#allocation4 + $0x10] sm:$0xff]
        %v730 = vld [vmem:[#allocation4 + $0x18] sm:$0xff]
        %v731 = vld [vmem:[#allocation4 + $0x20] sm:$0xff]
        %v732 = vld [vmem:[#allocation4 + $0x28] sm:$0xff]
        %v735 = vunpack.c.l.b16 %v725
        %v736 = vunpack.c.l.b16 %v726
        %v737 = vpack.c.b16 %v736, %v735
        %v744 = vunpack.c.l.b16 %v727
        %v745 = vunpack.c.h.b16 %v727
        %v746 = vunpack.c.l.b16 %v728
        %v747 = vunpack.c.h.b16 %v728
        %v748 = vunpack.c.l.b16 %v729
        %v749 = vunpack.c.h.b16 %v729
        %v750 = vunpack.c.l.b16 %v730
        %v751 = vunpack.c.h.b16 %v730
        %v752 = vunpack.c.l.b16 %v731
        %v753 = vunpack.c.h.b16 %v731
        %v754 = vunpack.c.l.b16 %v732
        %v755 = vunpack.c.h.b16 %v732
        %v756 = vpack.c.b16 %v746, %v744
        %v757 = vpack.c.b16 %v747, %v745
        %v758 = vpack.c.b16 %v750, %v748
        %v759 = vpack.c.b16 %v751, %v749
        %v760 = vpack.c.b16 %v754, %v752
        %v761 = vpack.c.b16 %v755, %v753
        %vm768 = vcmask 392192
        %v770 = vsel %vm768, %v737, 0
        %772 = vmatpush.bf16.msra.mxu0 0
        %773 = vmatpush.bf16.msra.mxu0 0
        %774 = vmatpush.bf16.msra.mxu0 0
        %775 = vmatpush.bf16.msra.mxu0 0
        %776 = vmatpush.bf16.msra.mxu0 0
        %777 = vmatpush.bf16.msra.mxu0 %v760
        %778 = vmatpush.bf16.msra.mxu0 %v758
        %779 = vmatpush.bf16.msra.mxu0 %v756
        %780 = vmatmul.bf16.gmra.mxu0 %v770
        %v781 = vpop.f32.mrf.mxu0
        %v782 = vadd.f32 0.0, %v781
        %v783 = vpop.f32.mrf.mxu0
        %v784 = vadd.f32 0.0, %v783
        %785 = vdwg.mxu0
        %786 = vmatpush.bf16.msra.mxu0 0
        %787 = vmatpush.bf16.msra.mxu0 0
        %788 = vmatpush.bf16.msra.mxu0 0
        %789 = vmatpush.bf16.msra.mxu0 0
        %790 = vmatpush.bf16.msra.mxu0 0
        %791 = vmatpush.bf16.msra.mxu0 %v761
        %792 = vmatpush.bf16.msra.mxu0 %v759
        %793 = vmatpush.bf16.msra.mxu0 %v757
        %794 = vmatmul.bf16.gmra.mxu0 %v770
        %v795 = vpop.f32.mrf.mxu0
        %v796 = vadd.f32 0.0, %v795
        %v797 = vpop.f32.mrf.mxu0
        %v798 = vadd.f32 0.0, %v797
        %799 = vdwg.mxu0
        %800 = vst [vmem:[#allocation5] sm:$0xff] %v782
        %vm801 = vcmask 130048
        %802 = vst.msk [vmem:[#allocation5 + $0x8] sm:$0xff] %vm801, %v796
        %803 = vst [vmem:[#allocation5 + $0x10] sm:$0xff] %v784
        %804 = vst.msk [vmem:[#allocation5 + $0x18] sm:$0xff] %vm801, %v798
        %v805 = vld [vmem:[#allocation3] sm:$0xff]
        %v806 = vld [vmem:[#allocation3 + $0x8] sm:$0xff]
        %809 = vrot.lane.b32.xlu0 %v805, 110
        %v810 = vpop.permute.xlu0 %809
        %811 = vrot.lane.b32.xlu0 %v806, 110
        %v812 = vpop.permute.xlu0 %811
        %v813 = vrot.slane %v810, 4
        %v814 = vrot.slane %v812, 4
        %vm815 = vcmask 900096
        %v816 = vsel %vm815, %v810, %v813
        %v817 = vsel %vm815, %v812, %v814
        %820 = vst.msk [vmem:[#allocation4] sm:$0xff] %vm688, %v816
        %821 = vst.msk [vmem:[#allocation4 + $0x8] sm:$0xff] %vm688, %v817
        %v822 = vld [vmem:[#allocation3] sm:$0xff]
        %v823 = vld [vmem:[#allocation3 + $0x8] sm:$0xff]
        %826 = vrot.lane.b32.xlu0 %v822, 109
        %v827 = vpop.permute.xlu0 %826
        %828 = vrot.lane.b32.xlu0 %v823, 109
        %v829 = vpop.permute.xlu0 %828
        %v830 = vrot.slane %v827, 4
        %v831 = vrot.slane %v829, 4
        %vm832 = vcmask 891904
        %v833 = vsel %vm832, %v827, %v830
        %v834 = vsel %vm832, %v829, %v831
        %837 = vst.msk [vmem:[#allocation4 + $0x10] sm:$0xff] %vm688, %v833
        %838 = vst.msk [vmem:[#allocation4 + $0x18] sm:$0xff] %vm688, %v834
        %v839 = vld [vmem:[#allocation3] sm:$0xff]
        %v840 = vld [vmem:[#allocation3 + $0x8] sm:$0xff]
        %843 = vrot.lane.b32.xlu0 %v839, 108
        %v844 = vpop.permute.xlu0 %843
        %845 = vrot.lane.b32.xlu0 %v840, 108
        %v846 = vpop.permute.xlu0 %845
        %v847 = vrot.slane %v844, 4
        %v848 = vrot.slane %v846, 4
        %vm849 = vcmask 883712
        %v850 = vsel %vm849, %v844, %v847
        %v851 = vsel %vm849, %v846, %v848
        %854 = vst.msk [vmem:[#allocation4 + $0x20] sm:$0xff] %vm688, %v850
        %855 = vst.msk [vmem:[#allocation4 + $0x28] sm:$0xff] %vm688, %v851
        %s856 = scalar_lea.vmem %s3, 8
        %v857 = vld [vmem:[%s856] sm:$0xf]
        %v858 = vld [vmem:[%s856 + $0x4] sm:$0xf]
        %v859 = vld [vmem:[#allocation4] sm:$0xff]
        %v860 = vld [vmem:[#allocation4 + $0x8] sm:$0xff]
        %v861 = vld [vmem:[#allocation4 + $0x10] sm:$0xff]
        %v862 = vld [vmem:[#allocation4 + $0x18] sm:$0xff]
        %v863 = vld [vmem:[#allocation4 + $0x20] sm:$0xff]
        %v864 = vld [vmem:[#allocation4 + $0x28] sm:$0xff]
        %v867 = vunpack.c.l.b16 %v857
        %v868 = vunpack.c.l.b16 %v858
        %v869 = vpack.c.b16 %v868, %v867
        %v876 = vunpack.c.l.b16 %v859
        %v877 = vunpack.c.h.b16 %v859
        %v878 = vunpack.c.l.b16 %v860
        %v879 = vunpack.c.h.b16 %v860
        %v880 = vunpack.c.l.b16 %v861
        %v881 = vunpack.c.h.b16 %v861
        %v882 = vunpack.c.l.b16 %v862
        %v883 = vunpack.c.h.b16 %v862
        %v884 = vunpack.c.l.b16 %v863
        %v885 = vunpack.c.h.b16 %v863
        %v886 = vunpack.c.l.b16 %v864
        %v887 = vunpack.c.h.b16 %v864
        %v888 = vpack.c.b16 %v878, %v876
        %v889 = vpack.c.b16 %v879, %v877
        %v890 = vpack.c.b16 %v882, %v880
        %v891 = vpack.c.b16 %v883, %v881
        %v892 = vpack.c.b16 %v886, %v884
        %v893 = vpack.c.b16 %v887, %v885
        %v901 = vsel %vm768, %v869, 0
        %903 = vmatpush.bf16.msra.mxu0 0
        %904 = vmatpush.bf16.msra.mxu0 0
        %905 = vmatpush.bf16.msra.mxu0 0
        %906 = vmatpush.bf16.msra.mxu0 0
        %907 = vmatpush.bf16.msra.mxu0 0
        %908 = vmatpush.bf16.msra.mxu0 %v892
        %909 = vmatpush.bf16.msra.mxu0 %v890
        %910 = vmatpush.bf16.msra.mxu0 %v888
        %911 = vmatmul.bf16.gmra.mxu0 %v901
        %v912 = vpop.f32.mrf.mxu0
        %v913 = vadd.f32 0.0, %v912
        %v914 = vpop.f32.mrf.mxu0
        %v915 = vadd.f32 0.0, %v914
        %916 = vdwg.mxu0
        %917 = vmatpush.bf16.msra.mxu0 0
        %918 = vmatpush.bf16.msra.mxu0 0
        %919 = vmatpush.bf16.msra.mxu0 0
        %920 = vmatpush.bf16.msra.mxu0 0
        %921 = vmatpush.bf16.msra.mxu0 0
        %922 = vmatpush.bf16.msra.mxu0 %v893
        %923 = vmatpush.bf16.msra.mxu0 %v891
        %924 = vmatpush.bf16.msra.mxu0 %v889
        %925 = vmatmul.bf16.gmra.mxu0 %v901
        %v926 = vpop.f32.mrf.mxu0
        %v927 = vadd.f32 0.0, %v926
        %v928 = vpop.f32.mrf.mxu0
        %v929 = vadd.f32 0.0, %v928
        %930 = vdwg.mxu0
        %v931 = vld [vmem:[#allocation5] sm:$0xff]
        %v932 = vld [vmem:[#allocation5 + $0x8] sm:$0xff]
        %v933 = vld [vmem:[#allocation5 + $0x10] sm:$0xff]
        %v934 = vld [vmem:[#allocation5 + $0x18] sm:$0xff]
        %v935 = vadd.f32 %v931, %v913
        %v936 = vadd.f32 %v932, %v927
        %v937 = vadd.f32 %v933, %v915
        %v938 = vadd.f32 %v934, %v929
        %939 = vst [vmem:[#allocation5] sm:$0xff] %v935
        %940 = vst.msk [vmem:[#allocation5 + $0x8] sm:$0xff] %vm801, %v936
        %941 = vst [vmem:[#allocation5 + $0x10] sm:$0xff] %v937
        %942 = vst.msk [vmem:[#allocation5 + $0x18] sm:$0xff] %vm801, %v938
        %v943 = vld [vmem:[#allocation3] sm:$0xff]
        %v944 = vld [vmem:[#allocation3 + $0x8] sm:$0xff]
        %947 = vrot.lane.b32.xlu0 %v943, 92
        %v948 = vpop.permute.xlu0 %947
        %949 = vrot.lane.b32.xlu0 %v944, 92
        %v950 = vpop.permute.xlu0 %949
        %v951 = vrot.slane %v948, 4
        %v952 = vrot.slane %v950, 4
        %vm953 = vcmask 752640
        %v954 = vsel %vm953, %v948, %v951
        %v955 = vsel %vm953, %v950, %v952
        %958 = vst.msk [vmem:[#allocation4] sm:$0xff] %vm688, %v954
        %959 = vst.msk [vmem:[#allocation4 + $0x8] sm:$0xff] %vm688, %v955
        %v960 = vld [vmem:[#allocation3] sm:$0xff]
        %v961 = vld [vmem:[#allocation3 + $0x8] sm:$0xff]
        %964 = vrot.lane.b32.xlu0 %v960, 91
        %v965 = vpop.permute.xlu0 %964
        %966 = vrot.lane.b32.xlu0 %v961, 91
        %v967 = vpop.permute.xlu0 %966
        %v968 = vrot.slane %v965, 4
        %v969 = vrot.slane %v967, 4
        %vm970 = vcmask 744448
        %v971 = vsel %vm970, %v965, %v968
        %v972 = vsel %vm970, %v967, %v969
        %975 = vst.msk [vmem:[#allocation4 + $0x10] sm:$0xff] %vm688, %v971
        %976 = vst.msk [vmem:[#allocation4 + $0x18] sm:$0xff] %vm688, %v972
        %v977 = vld [vmem:[#allocation3] sm:$0xff]
        %v978 = vld [vmem:[#allocation3 + $0x8] sm:$0xff]
        %981 = vrot.lane.b32.xlu0 %v977, 90
        %v982 = vpop.permute.xlu0 %981
        %983 = vrot.lane.b32.xlu0 %v978, 90
        %v984 = vpop.permute.xlu0 %983
        %v985 = vrot.slane %v982, 4
        %v986 = vrot.slane %v984, 4
        %vm987 = vcmask 736256
        %v988 = vsel %vm987, %v982, %v985
        %v989 = vsel %vm987, %v984, %v986
        %992 = vst.msk [vmem:[#allocation4 + $0x20] sm:$0xff] %vm688, %v988
        %993 = vst.msk [vmem:[#allocation4 + $0x28] sm:$0xff] %vm688, %v989
        %s994 = scalar_lea.vmem %s3, 16
        %v995 = vld [vmem:[%s994] sm:$0xf]
        %v996 = vld [vmem:[%s994 + $0x4] sm:$0xf]
        %v997 = vld [vmem:[#allocation4] sm:$0xff]
        %v998 = vld [vmem:[#allocation4 + $0x8] sm:$0xff]
        %v999 = vld [vmem:[#allocation4 + $0x10] sm:$0xff]
        %v1000 = vld [vmem:[#allocation4 + $0x18] sm:$0xff]
        %v1001 = vld [vmem:[#allocation4 + $0x20] sm:$0xff]
        %v1002 = vld [vmem:[#allocation4 + $0x28] sm:$0xff]
        %v1005 = vunpack.c.l.b16 %v995
        %v1006 = vunpack.c.l.b16 %v996
        %v1007 = vpack.c.b16 %v1006, %v1005
        %v1014 = vunpack.c.l.b16 %v997
        %v1015 = vunpack.c.h.b16 %v997
        %v1016 = vunpack.c.l.b16 %v998
        %v1017 = vunpack.c.h.b16 %v998
        %v1018 = vunpack.c.l.b16 %v999
        %v1019 = vunpack.c.h.b16 %v999
        %v1020 = vunpack.c.l.b16 %v1000
        %v1021 = vunpack.c.h.b16 %v1000
        %v1022 = vunpack.c.l.b16 %v1001
        %v1023 = vunpack.c.h.b16 %v1001
        %v1024 = vunpack.c.l.b16 %v1002
        %v1025 = vunpack.c.h.b16 %v1002
        %v1026 = vpack.c.b16 %v1016, %v1014
        %v1027 = vpack.c.b16 %v1017, %v1015
        %v1028 = vpack.c.b16 %v1020, %v1018
        %v1029 = vpack.c.b16 %v1021, %v1019
        %v1030 = vpack.c.b16 %v1024, %v1022
        %v1031 = vpack.c.b16 %v1025, %v1023
        %v1039 = vsel %vm768, %v1007, 0
        %1041 = vmatpush.bf16.msra.mxu0 0
        %1042 = vmatpush.bf16.msra.mxu0 0
        %1043 = vmatpush.bf16.msra.mxu0 0
        %1044 = vmatpush.bf16.msra.mxu0 0
        %1045 = vmatpush.bf16.msra.mxu0 0
        %1046 = vmatpush.bf16.msra.mxu0 %v1030
        %1047 = vmatpush.bf16.msra.mxu0 %v1028
        %1048 = vmatpush.bf16.msra.mxu0 %v1026
        %1049 = vmatmul.bf16.gmra.mxu0 %v1039
        %v1050 = vpop.f32.mrf.mxu0
        %v1051 = vadd.f32 0.0, %v1050
        %v1052 = vpop.f32.mrf.mxu0
        %v1053 = vadd.f32 0.0, %v1052
        %1054 = vdwg.mxu0
        %1055 = vmatpush.bf16.msra.mxu0 0
        %1056 = vmatpush.bf16.msra.mxu0 0
        %1057 = vmatpush.bf16.msra.mxu0 0
        %1058 = vmatpush.bf16.msra.mxu0 0
        %1059 = vmatpush.bf16.msra.mxu0 0
        %1060 = vmatpush.bf16.msra.mxu0 %v1031
        %1061 = vmatpush.bf16.msra.mxu0 %v1029
        %1062 = vmatpush.bf16.msra.mxu0 %v1027
        %1063 = vmatmul.bf16.gmra.mxu0 %v1039
        %v1064 = vpop.f32.mrf.mxu0
        %v1065 = vadd.f32 0.0, %v1064
        %v1066 = vpop.f32.mrf.mxu0
        %v1067 = vadd.f32 0.0, %v1066
        %1068 = vdwg.mxu0
        %v1069 = vld [vmem:[#allocation5] sm:$0xff]
        %v1070 = vld [vmem:[#allocation5 + $0x8] sm:$0xff]
        %v1071 = vld [vmem:[#allocation5 + $0x10] sm:$0xff]
        %v1072 = vld [vmem:[#allocation5 + $0x18] sm:$0xff]
        %v1073 = vadd.f32 %v1069, %v1051
        %v1074 = vadd.f32 %v1070, %v1065
        %v1075 = vadd.f32 %v1071, %v1053
        %v1076 = vadd.f32 %v1072, %v1067
        %1077 = vst [vmem:[#allocation5] sm:$0xff] %v1073
        %1078 = vst.msk [vmem:[#allocation5 + $0x8] sm:$0xff] %vm801, %v1074
        %1079 = vst [vmem:[#allocation5 + $0x10] sm:$0xff] %v1075
        %1080 = vst.msk [vmem:[#allocation5 + $0x18] sm:$0xff] %vm801, %v1076
        %v1081 = vld [vmem:[%s5] sm:$0xf]
        %v1082 = vld [vmem:[%s5 + $0x4] sm:$0xf]
        %v1083 = vld [vmem:[%s327] sm:$0xf]
        %v1086 = vunpack.c.l.b16 %v1081
        %v1087 = vunpack.c.l.b16 %v1082
        %v1088 = vpack.c.b16 %v1087, %v1086
        %1090 = vst [vmem:[#allocation1] ss:$4 sm:$0xff] %v1083
        %v1091 = vld.sshfl [vmem:[#allocation1] sm:$0xff pattern:$0x73625140]
        %v1093 = vld.sshfl [vmem:[#allocation1 + $0x8] sm:$0xff pattern:$0x73625140]
        %1095 = vrot.lane.b32.xlu0 %v1091, 90
        %v1096 = vpop.permute.xlu0 %1095
        %1097 = vrot.lane.b32.xlu0 %v1093, 90
        %v1098 = vpop.permute.xlu0 %1097
        %v1099 = vsel %vm987, %v1096, %v1098
        %vm1100 = vcmask 23552
        %v1102 = vsel %vm1100, %v1088, 0
        %vm1104 = vcmask 1040384
        %vm1105 = vcmask 1041408
        %v1106 = vsel %vm1104, 4294967295, 65535
        %v1107 = vsel %vm1105, %v1106, 0
        %v1109 = vand.u32 %v1099, %v1107
        %v1112 = vand.u32 %v1098, %v1107
        %1114 = vmatpush.bf16.msra.mxu0 0
        %1115 = vmatpush.bf16.msra.mxu0 0
        %1116 = vmatpush.bf16.msra.mxu0 0
        %1117 = vmatpush.bf16.msra.mxu0 0
        %1118 = vmatpush.bf16.msra.mxu0 0
        %1119 = vmatpush.bf16.msra.mxu0 0
        %1120 = vmatpush.bf16.msra.mxu0 0
        %1121 = vmatpush.bf16.msra.mxu0 %v1109
        %1122 = vmatmul.bf16.gmra.mxu0 %v1102
        %v1123 = vpop.f32.mrf.mxu0
        %v1124 = vadd.f32 0.0, %v1123
        %v1125 = vpop.f32.mrf.mxu0
        %v1126 = vadd.f32 0.0, %v1125
        %1127 = vdwg.mxu0
        %1128 = vmatpush.bf16.msra.mxu0 0
        %1129 = vmatpush.bf16.msra.mxu0 0
        %1130 = vmatpush.bf16.msra.mxu0 0
        %1131 = vmatpush.bf16.msra.mxu0 0
        %1132 = vmatpush.bf16.msra.mxu0 0
        %1133 = vmatpush.bf16.msra.mxu0 0
        %1134 = vmatpush.bf16.msra.mxu0 0
        %1135 = vmatpush.bf16.msra.mxu0 %v1112
        %1136 = vmatmul.bf16.gmra.mxu0 %v1102
        %v1137 = vpop.f32.mrf.mxu0
        %v1138 = vadd.f32 0.0, %v1137
        %v1139 = vpop.f32.mrf.mxu0
        %v1140 = vadd.f32 0.0, %v1139
        %1141 = vdwg.mxu0
        %v1142 = vld [vmem:[%s6] sm:$0xff]
        %v1143 = vld [vmem:[%s6 + $0x8] sm:$0xff]
        %1145 = vset.pattern.permute.xlu0 0
        %1146 = vperm.xlu0 %1145, %v1142
        %v1147 = vpop.permute.xlu0 %1146
        %1150 = vset.pattern.permute.xlu0 0
        %1151 = vperm.xlu0 %1150, %v1143
        %v1152 = vpop.permute.xlu0 %1151
        %v1154 = vmul.f32 %v1124, %v1147
        %v1155 = vmul.f32 %v1138, %v1147
        %v1156 = vmul.f32 %v1126, %v1152
        %v1157 = vmul.f32 %v1140, %v1152
        %1158 = vset.pattern.permute.xlu0 1
        %1159 = vperm.xlu0 %1158, %v1142
        %v1160 = vpop.permute.xlu0 %1159
        %1162 = vset.pattern.permute.xlu0 1
        %1163 = vperm.xlu0 %1162, %v1143
        %v1164 = vpop.permute.xlu0 %1163
        %v1166 = vadd.f32 %v1154, %v1160
        %v1167 = vadd.f32 %v1155, %v1160
        %v1168 = vadd.f32 %v1156, %v1164
        %v1169 = vadd.f32 %v1157, %v1164
        %1170 = vst [vmem:[#allocation6] sm:$0xff] %v1166
        %1171 = vst.msk [vmem:[#allocation6 + $0x8] sm:$0xff] %vm801, %v1167
        %1172 = vst [vmem:[#allocation6 + $0x10] sm:$0xff] %v1168
        %1173 = vst.msk [vmem:[#allocation6 + $0x18] sm:$0xff] %vm801, %v1169
        %v1174 = vld [vmem:[%s4] sm:$0xff]
        %v1175 = vld [vmem:[%s4 + $0x8] sm:$0xff]
        %v1176 = vld [vmem:[#allocation5] sm:$0xff]
        %v1177 = vld [vmem:[#allocation5 + $0x10] sm:$0xff]
        %1179 = vset.pattern.permute.xlu0 0
        %1180 = vperm.xlu0 %1179, %v1174
        %v1181 = vpop.permute.xlu0 %1180
        %1184 = vset.pattern.permute.xlu0 0
        %1185 = vperm.xlu0 %1184, %v1175
        %v1186 = vpop.permute.xlu0 %1185
        %v1188 = vmul.f32 %v1176, %v1181
        %v1189 = vmul.f32 %v1177, %v1186
        %1190 = vset.pattern.permute.xlu0 1
        %1191 = vperm.xlu0 %1190, %v1174
        %v1192 = vpop.permute.xlu0 %1191
        %1194 = vset.pattern.permute.xlu0 1
        %1195 = vperm.xlu0 %1194, %v1175
        %v1196 = vpop.permute.xlu0 %1195
        %v1198 = vadd.f32 %v1188, %v1192
        %v1199 = vadd.f32 %v1189, %v1196
        %v1200 = vmax.f32 %v1198, 0.0
        %v1201 = vmax.f32 %v1199, 0.0
        %v1202 = vld [vmem:[#allocation6] sm:$0xff]
        %v1203 = vld [vmem:[#allocation6 + $0x10] sm:$0xff]
        %v1204 = vadd.f32 %v1200, %v1202
        %v1205 = vadd.f32 %v1201, %v1203
        %1206 = vst.msk [vmem:[%s318] sm:$0xff] %vm801, %v1204
        %1207 = vst.msk [vmem:[%s318 + $0x8] sm:$0xff] %vm801, %v1205
        %v1208 = vld [vmem:[#allocation5] sm:$0xff]
        %v1209 = vld [vmem:[#allocation5 + $0x10] sm:$0xff]
        %v1210 = vmul.f32 %v1208, %v1181
        %v1211 = vmul.f32 %v1209, %v1186
        %v1212 = vadd.f32 %v1210, %v1192
        %v1213 = vadd.f32 %v1211, %v1196
        %v1214 = vmax.f32 %v1212, 0.0
        %v1215 = vmax.f32 %v1213, 0.0
        %v1216 = vld [vmem:[#allocation6] sm:$0xff]
        %v1217 = vld [vmem:[#allocation6 + $0x10] sm:$0xff]
        %v1218 = vadd.f32 %v1214, %v1216
        %v1219 = vadd.f32 %v1215, %v1217
        %1222 = vrot.lane.b32.xlu0 %v1218, 126
        %v1223 = vpop.permute.xlu0 %1222
        %1224 = vrot.lane.b32.xlu0 %v1219, 126
        %v1225 = vpop.permute.xlu0 %1224
        %vm1228 = vcmask 261248
        %1229 = vst.msk [vmem:[%s318] sm:$0xff] %vm1228, %v1223
        %1230 = vst.msk [vmem:[%s318 + $0x8] sm:$0xff] %vm1228, %v1225
        %v1231 = vld [vmem:[#allocation5] sm:$0xff]
        %v1232 = vld [vmem:[#allocation5 + $0x10] sm:$0xff]
        %v1233 = vmul.f32 %v1231, %v1181
        %v1234 = vmul.f32 %v1232, %v1186
        %v1235 = vadd.f32 %v1233, %v1192
        %v1236 = vadd.f32 %v1234, %v1196
        %v1237 = vmax.f32 %v1235, 0.0
        %v1238 = vmax.f32 %v1236, 0.0
        %v1239 = vld [vmem:[#allocation6] sm:$0xff]
        %v1240 = vld [vmem:[#allocation6 + $0x10] sm:$0xff]
        %v1241 = vadd.f32 %v1237, %v1239
        %v1242 = vadd.f32 %v1238, %v1240
        %1245 = vrot.lane.b32.xlu0 %v1241, 124
        %v1246 = vpop.permute.xlu0 %1245
        %1247 = vrot.lane.b32.xlu0 %v1242, 124
        %v1248 = vpop.permute.xlu0 %1247
        %vm1251 = vcmask 392448
        %1252 = vst.msk [vmem:[%s318] sm:$0xff] %vm1251, %v1246
        %1253 = vst.msk [vmem:[%s318 + $0x8] sm:$0xff] %vm1251, %v1248
        %v1254 = vld [vmem:[#allocation5] sm:$0xff]
        %v1255 = vld [vmem:[#allocation5 + $0x10] sm:$0xff]
        %v1256 = vmul.f32 %v1254, %v1181
        %v1257 = vmul.f32 %v1255, %v1186
        %v1258 = vadd.f32 %v1256, %v1192
        %v1259 = vadd.f32 %v1257, %v1196
        %v1260 = vmax.f32 %v1258, 0.0
        %v1261 = vmax.f32 %v1259, 0.0
        %v1262 = vld [vmem:[#allocation6] sm:$0xff]
        %v1263 = vld [vmem:[#allocation6 + $0x10] sm:$0xff]
        %v1264 = vadd.f32 %v1260, %v1262
        %v1265 = vadd.f32 %v1261, %v1263
        %1268 = vrot.lane.b32.xlu0 %v1264, 122
        %v1269 = vpop.permute.xlu0 %1268
        %1270 = vrot.lane.b32.xlu0 %v1265, 122
        %v1271 = vpop.permute.xlu0 %1270
        %vm1274 = vcmask 523648
        %1275 = vst.msk [vmem:[%s318] sm:$0xff] %vm1274, %v1269
        %1276 = vst.msk [vmem:[%s318 + $0x8] sm:$0xff] %vm1274, %v1271
        %v1277 = vld [vmem:[#allocation5] sm:$0xff]
        %v1278 = vld [vmem:[#allocation5 + $0x10] sm:$0xff]
        %v1279 = vmul.f32 %v1277, %v1181
        %v1280 = vmul.f32 %v1278, %v1186
        %v1281 = vadd.f32 %v1279, %v1192
        %v1282 = vadd.f32 %v1280, %v1196
        %v1283 = vmax.f32 %v1281, 0.0
        %v1284 = vmax.f32 %v1282, 0.0
        %v1285 = vld [vmem:[#allocation6] sm:$0xff]
        %v1286 = vld [vmem:[#allocation6 + $0x10] sm:$0xff]
        %v1287 = vadd.f32 %v1283, %v1285
        %v1288 = vadd.f32 %v1284, %v1286
        %1291 = vrot.lane.b32.xlu0 %v1287, 120
        %v1292 = vpop.permute.xlu0 %1291
        %1293 = vrot.lane.b32.xlu0 %v1288, 120
        %v1294 = vpop.permute.xlu0 %1293
        %vm1297 = vcmask 654848
        %1298 = vst.msk [vmem:[%s318] sm:$0xff] %vm1297, %v1292
        %1299 = vst.msk [vmem:[%s318 + $0x8] sm:$0xff] %vm1297, %v1294
        %v1300 = vld [vmem:[#allocation5] sm:$0xff]
        %v1301 = vld [vmem:[#allocation5 + $0x10] sm:$0xff]
        %v1302 = vmul.f32 %v1300, %v1181
        %v1303 = vmul.f32 %v1301, %v1186
        %v1304 = vadd.f32 %v1302, %v1192
        %v1305 = vadd.f32 %v1303, %v1196
        %v1306 = vmax.f32 %v1304, 0.0
        %v1307 = vmax.f32 %v1305, 0.0
        %v1308 = vld [vmem:[#allocation6] sm:$0xff]
        %v1309 = vld [vmem:[#allocation6 + $0x10] sm:$0xff]
        %v1310 = vadd.f32 %v1306, %v1308
        %v1311 = vadd.f32 %v1307, %v1309
        %1314 = vrot.lane.b32.xlu0 %v1310, 118
        %v1315 = vpop.permute.xlu0 %1314
        %1316 = vrot.lane.b32.xlu0 %v1311, 118
        %v1317 = vpop.permute.xlu0 %1316
        %vm1320 = vcmask 786048
        %1321 = vst.msk [vmem:[%s318] sm:$0xff] %vm1320, %v1315
        %1322 = vst.msk [vmem:[%s318 + $0x8] sm:$0xff] %vm1320, %v1317
        %v1323 = vld [vmem:[#allocation5] sm:$0xff]
        %v1324 = vld [vmem:[#allocation5 + $0x10] sm:$0xff]
        %v1325 = vmul.f32 %v1323, %v1181
        %v1326 = vmul.f32 %v1324, %v1186
        %v1327 = vadd.f32 %v1325, %v1192
        %v1328 = vadd.f32 %v1326, %v1196
        %v1329 = vmax.f32 %v1327, 0.0
        %v1330 = vmax.f32 %v1328, 0.0
        %v1331 = vld [vmem:[#allocation6] sm:$0xff]
        %v1332 = vld [vmem:[#allocation6 + $0x10] sm:$0xff]
        %v1333 = vadd.f32 %v1329, %v1331
        %v1334 = vadd.f32 %v1330, %v1332
        %1337 = vrot.lane.b32.xlu0 %v1333, 116
        %v1338 = vpop.permute.xlu0 %1337
        %1339 = vrot.lane.b32.xlu0 %v1334, 116
        %v1340 = vpop.permute.xlu0 %1339
        %vm1343 = vcmask 917248
        %1344 = vst.msk [vmem:[%s318] sm:$0xff] %vm1343, %v1338
        %1345 = vst.msk [vmem:[%s318 + $0x8] sm:$0xff] %vm1343, %v1340
        %v1346 = vld [vmem:[#allocation5] sm:$0xff]
        %v1347 = vld [vmem:[#allocation5 + $0x8] sm:$0xff]
        %v1348 = vld [vmem:[#allocation5 + $0x10] sm:$0xff]
        %v1349 = vld [vmem:[#allocation5 + $0x18] sm:$0xff]
        %v1350 = vmul.f32 %v1346, %v1181
        %v1351 = vmul.f32 %v1347, %v1181
        %v1352 = vmul.f32 %v1348, %v1186
        %v1353 = vmul.f32 %v1349, %v1186
        %v1354 = vadd.f32 %v1350, %v1192
        %v1355 = vadd.f32 %v1351, %v1192
        %v1356 = vadd.f32 %v1352, %v1196
        %v1357 = vadd.f32 %v1353, %v1196
        %v1358 = vmax.f32 %v1354, 0.0
        %v1359 = vmax.f32 %v1355, 0.0
        %v1360 = vmax.f32 %v1356, 0.0
        %v1361 = vmax.f32 %v1357, 0.0
        %v1362 = vld [vmem:[#allocation6] sm:$0xff]
        %v1363 = vld [vmem:[#allocation6 + $0x8] sm:$0xff]
        %v1364 = vld [vmem:[#allocation6 + $0x10] sm:$0xff]
        %v1365 = vld [vmem:[#allocation6 + $0x18] sm:$0xff]
        %v1366 = vadd.f32 %v1358, %v1362
        %v1367 = vadd.f32 %v1359, %v1363
        %v1368 = vadd.f32 %v1360, %v1364
        %v1369 = vadd.f32 %v1361, %v1365
        %1374 = vrot.lane.b32.xlu0 %v1366, 114
        %v1375 = vpop.permute.xlu0 %1374
        %1376 = vrot.lane.b32.xlu0 %v1367, 114
        %v1377 = vpop.permute.xlu0 %1376
        %1378 = vrot.lane.b32.xlu0 %v1368, 114
        %v1379 = vpop.permute.xlu0 %1378
        %1380 = vrot.lane.b32.xlu0 %v1369, 114
        %v1381 = vpop.permute.xlu0 %1380
        %vm1382 = vcmask 932864
        %v1383 = vsel %vm1382, %v1375, %v1377
        %v1384 = vsel %vm1382, %v1379, %v1381
        %vm1387 = vcmask 1048448
        %1388 = vst.msk [vmem:[%s318] sm:$0xff] %vm1387, %v1383
        %1389 = vst.msk [vmem:[%s318 + $0x8] sm:$0xff] %vm1387, %v1384
        %s1390 = sand.u32 %s216, 1
        %s1391 = sand.u32 %s216, 1
        %s1392 = smul.addr %s1391, 16
        %s1393 = scalar_lea.vmem [#allocation7], %s1392
        // Predicated region
        $region61: #{inconv_forward.1} parent=51 // pred_check
          %p1394 = pneg %p226
        $region62: #{inconv_forward.1} parent=51 // pred_check_branch
          %1396 = sbr.rel (%p1394) target = $region64
        $region63: #{inconv_forward.1} parent=51 // pred_region
          %s1397 = smul.addr %s23, 6
          %s1398 = sadd.s32 %s24, %s1397
          %s1399 = smul.addr %s1398, 8
          %s1400 = scalar_lea.vmem %s8, %s1399
          // Predicated region
          $region65: #{inconv_forward.1} parent=63 // pred_check
            _
          $region66: #{inconv_forward.1} parent=63 // pred_check_branch
            %1402 = sbr.rel (0) target = $region68
          $region67: #{inconv_forward.1} parent=63 // pred_region
            // Predicated region
            $region69: #{inconv_forward.1} parent=67 // pred_check
              _
            $region70: #{inconv_forward.1} parent=67 // pred_check_branch
              %1404 = sbr.rel (0) target = $region72
            $region71: #{inconv_forward.1} parent=67 // pred_region
              // Predicated region
              $region84: #{inconv_forward.1} parent=71 // pred_check
                _
              $region85: #{inconv_forward.1} parent=71 // pred_check_branch
                %1422 = sbr.rel (0) target = $region87
              $region86: #{inconv_forward.1} parent=71 // pred_region
                loop: start=0, step=1, limit=1
                $region88: #{inconv_forward.1} parent=86 // loop_pre_header
                  _
                $region89: #{inconv_forward.1} parent=86 // loop_header
                  %s1424 = sphi 0, %s1428
                  %p1425 = scmp.ge.s32.totalorder %s1424, 1
                  %s1429 = sphi %s1393, %s1393
                  %s1430 = sphi %s1400, %s1400
                $region90: #{inconv_forward.1} parent=86 // loop_header_branch
                  %1427 = sbr.rel (%p1425) target = $region94
                $region91: #{inconv_forward.1} parent=86 // loop_body
                  %v1431 = vld [vmem:[%s1429] sm:$0xff]
                  %1432 = vst [vmem:[%s1430] sm:$0xff] %v1431
                  %v1433 = vld [vmem:[%s1429 + $0x8] sm:$0xff]
                  %1434 = vst [vmem:[%s1430 + $0x18] sm:$0xff] %v1433
                $region92: #{inconv_forward.1} parent=86 // loop_footer
                  %s1428 = sadd.s32 1, %s1424
                $region93: #{inconv_forward.1} parent=86 // loop_footer_branch
                  %1423 = sbr.rel target = $region89
                $region94: #{inconv_forward.1} parent=86 // loop_exit
                  _
              $region87: #{inconv_forward.1} parent=71 // pred_fallthru
                _
              // Predicated region
              $region95: #{inconv_forward.1} parent=71 // pred_check
                _
              $region96: #{inconv_forward.1} parent=71 // pred_check_branch
                %1436 = sbr.rel target = $region98
              $region97: #{inconv_forward.1} parent=71 // pred_region
                _
              $region98: #{inconv_forward.1} parent=71 // pred_fallthru
                _
            $region72: #{inconv_forward.1} parent=67 // pred_fallthru
              _
            // Predicated region
            $region73: #{inconv_forward.1} parent=67 // pred_check
              _
            $region74: #{inconv_forward.1} parent=67 // pred_check_branch
              %1406 = sbr.rel target = $region76
            $region75: #{inconv_forward.1} parent=67 // pred_region
              %s1408 = ssub.s32 256, 1
              loop: start=0, step=1, limit=1
              $region77: #{inconv_forward.1} parent=75 // loop_pre_header
                _
              $region78: #{inconv_forward.1} parent=75 // loop_header
                %s1410 = sphi 0, %s1414
                %p1411 = scmp.ge.s32.totalorder %s1410, 1
                %s1415 = sphi %s1393, %s1393
                %s1416 = sphi %s1400, %s1400
              $region79: #{inconv_forward.1} parent=75 // loop_header_branch
                %1413 = sbr.rel (%p1411) target = $region83
              $region80: #{inconv_forward.1} parent=75 // loop_body
                %v1417 = vld [vmem:[%s1415] sm:%s1408]
                %1418 = vst [vmem:[%s1416] sm:%s1408] %v1417
                %v1419 = vld [vmem:[%s1415 + $0x8] sm:%s1408]
                %1420 = vst [vmem:[%s1416 + $0x18] sm:%s1408] %v1419
              $region81: #{inconv_forward.1} parent=75 // loop_footer
                %s1414 = sadd.s32 1, %s1410
              $region82: #{inconv_forward.1} parent=75 // loop_footer_branch
                %1409 = sbr.rel target = $region78
              $region83: #{inconv_forward.1} parent=75 // loop_exit
                _
            $region76: #{inconv_forward.1} parent=67 // pred_fallthru
              _
          $region68: #{inconv_forward.1} parent=63 // pred_fallthru
            _
          %1437 = vnop
        $region64: #{inconv_forward.1} parent=51 // pred_fallthru
          _
      $region52: #{inconv_forward.1} parent=5 // pred_fallthru
        _
      %p1438 = scmp.le.s32.totalorder 2, %s14
      // Predicated region
      $region99: #{inconv_forward.1} parent=5 // pred_check
        %p1439 = pneg %p1438
      $region100: #{inconv_forward.1} parent=5 // pred_check_branch
        %1441 = sbr.rel (%p1439) target = $region102
      $region101: #{inconv_forward.1} parent=5 // pred_region
        %s1442 = ssub.s32 %s14, 2
        // Predicated region
        $region103: #{inconv_forward.1} parent=101 // pred_check
          %p1443 = pneg %p232
        $region104: #{inconv_forward.1} parent=101 // pred_check_branch
          %1445 = sbr.rel (%p1443) target = $region106
        $region105: #{inconv_forward.1} parent=101 // pred_region
          %s1446 = sand.u32 %s217, 1
          %s1447 = sand.u32 %s217, 1
          %s1448 = smul.addr %s1447, 16
          %s1449 = scalar_lea.vmem [#allocation7], %s1448
        $region106: #{inconv_forward.1} parent=101 // pred_fallthru
          _
      $region102: #{inconv_forward.1} parent=5 // pred_fallthru
        _
    $region6: #{inconv_forward.1} parent=1 // loop_footer
      %s18 = sadd.s32 1, %s14
    $region7: #{inconv_forward.1} parent=1 // loop_footer_branch
      %13 = sbr.rel target = $region3
    $region8: #{inconv_forward.1} parent=1 // loop_exit
      _

</llo_original>
